<compile_context>
chip_gen: v5e
topology: v5e:2x2
jax: 0.10.0
libtpu: 0.0.40
codegen_flags: <defaults>
</compile_context>

<pallas_src>
import functools

import jax
import jax.numpy as jnp
import numpy as np
from jax.experimental import pallas as pl
from jax.experimental.pallas import tpu as pltpu

F_IN = 333        # fmri_indim of Network_regress_score_out333
D = 512           # feature width implied by Affinity(512)
NUM_TASKS = 28    # MultiTaskRegressionNetwork(num_tasks=28)
EPS = 1e-8        # torch F.cosine_similarity eps


def _combined_kernel(x_ref, that_ref, thead_ref, wfe_ref, bfe_ref,
                     wlin_ref, blin_ref, whd_ref, o_ref, *, b_blk, seq):
    f32 = jnp.float32
    bf16 = jnp.bfloat16
    t_len = that_ref.shape[0]
    n_pad = whd_ref.shape[1]

    x = x_ref[...]                                                     # (b_blk*seq, F_PAD) f32

    # TODO(synk): Network_regress_score_out333 (ViT, depth=1, heads=16) is not defined in the
    # provided source; approximated by a single linear embed F_IN -> D (batch folded into M).
    feat = jnp.dot(x.astype(bf16), wfe_ref[...],
                   preferred_element_type=f32) + bfe_ref[...]          # (M, D) f32

    # TODO(synk): Affinity(512) internals are not in the source; approximated by a linear
    # layer followed by cosine similarity against the (pre-normalized) text rows.
    f1 = jnp.dot(feat.astype(bf16), wlin_ref[...],
                 preferred_element_type=f32) + blin_ref[...]           # (M, D) f32

    # row-wise cosine scale for the fMRI side (text rows pre-normalized in the wrapper)
    fsq = jnp.sum(f1 * f1, axis=-1, keepdims=True)                     # (M, 1)
    fhat = f1 * jax.lax.rsqrt(jnp.maximum(fsq, EPS * EPS))             # (M, D)

    that = that_ref[...]                                               # (T, D) bf16

    mixes = []
    for b in range(b_blk):                                             # unrolled, tiny b_blk
        lo = b * seq
        fhat_b = fhat[lo:lo + seq, :].astype(bf16)                     # (S, D)
        feat_b = feat[lo:lo + seq, :].astype(bf16)                     # (S, D)

        # cosine similarity, built directly in (T, S) orientation: text @ fmri^T
        sim_t = jax.lax.dot_general(that, fhat_b, (((1,), (1,)), ((), ())),
                                    preferred_element_type=f32)        # (T, S)

        # TODO(synk): InstanceNorm2d + sinkhorn_rpm(n_iters=100) are approximated by a single
        # exp + normalization over the fMRI-sequence axis (same as the simplified reference).
        e = jnp.exp(sim_t)                                             # cos-sim in [-1,1] -> safe
        ns_t = e / jnp.sum(e, axis=-1, keepdims=True)                  # (T, S)

        # features_mean^T = ns^T @ features, per batch element
        mixes.append(jnp.dot(ns_t.astype(bf16), feat_b,
                             preferred_element_type=f32))              # (T, D)

    mix = jnp.concatenate(mixes, axis=0) if b_blk > 1 else mixes[0]    # (b_blk*T, D)

    # split task head: fMRI half here, text half precomputed in the wrapper (thead)
    pred = jnp.dot(mix.astype(bf16), whd_ref[...],
                   preferred_element_type=f32)                         # (b_blk*T, n_pad)
    pred = pred.reshape(b_blk, t_len, n_pad) + thead_ref[...][None, :, :]
    o_ref[...] = pred.astype(o_ref.dtype)                              # lane-dense (last dim 128)


def combined_model_sink333(fmri, text, params):
    """Simplified CombinedModel_sink333 forward. Returns (prediction, regress_para)."""
    wfe, bfe, wlin, blin, whead, bhead = params
    B, S, f_in = fmri.shape
    T = text.shape[1]
    d = wlin.shape[0]
    n_tasks = whead.shape[1]

    f_pad = ((f_in + 127) // 128) * 128      # 333 -> 384 : lane-aligned K for the MXU
    n_pad = ((n_tasks + 127) // 128) * 128   # 28  -> 128 : lane-dense output stores

    bf16 = jnp.bfloat16
    f32 = jnp.float32

    # ---- batch-invariant / one-time prep, hoisted out of the kernel ----
    x = fmri
    wfe_p = wfe
    if f_pad != f_in:
        x = jnp.pad(x, ((0, 0), (0, 0), (0, f_pad - f_in)))
        wfe_p = jnp.pad(wfe, ((0, f_pad - f_in), (0, 0)))
    x2d = x.reshape(B * S, f_pad)            # fold batch into the matmul M dimension

    tx = text[1]                                                        # (T, D), shared across batch
    tsq = jnp.sum(tx * tx, axis=-1, keepdims=True)
    that = (tx * jax.lax.rsqrt(jnp.maximum(tsq, EPS * EPS))).astype(bf16)

    w_top = whead[:d]                                                   # fMRI half of the head
    w_bot = whead[d:]                                                   # text half of the head
    thead = jnp.dot(tx.astype(bf16), w_bot.astype(bf16),
                    preferred_element_type=f32) + bhead                 # (T, n_tasks), hoisted
    if n_pad != n_tasks:
        w_top = jnp.pad(w_top, ((0, 0), (0, n_pad - n_tasks)))
        thead = jnp.pad(thead, ((0, 0), (0, n_pad - n_tasks)))

    # bf16 weights: halves HBM->VMEM traffic and feeds the MXU at bf16 rate
    wfe_b = wfe_p.astype(bf16)
    wlin_b = wlin.astype(bf16)
    w_top_b = w_top.astype(bf16)

    b_blk = B                   # whole batch per grid step at these sizes; chunk for large B
    grid = (B // b_blk,)

    kernel = functools.partial(_combined_kernel, b_blk=b_blk, seq=S)

    pred_pad = pl.pallas_call(
        kernel,
        out_shape=jax.ShapeDtypeStruct((B, T, n_pad), f32),
        grid_spec=pltpu.PrefetchScalarGridSpec(
            num_scalar_prefetch=0,
            grid=grid,
            in_specs=[
                pl.BlockSpec((b_blk * S, f_pad), lambda b: (b, 0)),     # folded fmri
                pl.BlockSpec((T, d), lambda b: (0, 0)),                 # normalized text rows
                pl.BlockSpec((T, n_pad), lambda b: (0, 0)),             # hoisted text head
                pl.BlockSpec((f_pad, d), lambda b: (0, 0)),             # W feature extractor
                pl.BlockSpec((1, d), lambda b: (0, 0)),                 # b feature extractor
                pl.BlockSpec((d, d), lambda b: (0, 0)),                 # W affinity linear
                pl.BlockSpec((1, d), lambda b: (0, 0)),                 # b affinity linear
                pl.BlockSpec((d, n_pad), lambda b: (0, 0)),             # W head (fMRI half)
            ],
            out_specs=pl.BlockSpec((b_blk, T, n_pad), lambda b: (b, 0, 0)),
        ),
        compiler_params=pltpu.CompilerParams(
            dimension_semantics=("parallel",)),   # shards batch blocks across TCs when grid > 1
    )(x2d, that, thead, wfe_b, bfe, wlin_b, blin, w_top_b)

    prediction = pred_pad[:, :, :n_tasks]
    regress_para = (whead, bhead)                 # regression parameters of the multi-task head
    return prediction, regress_para


def _reference(fmri, text, params):
    """Straightforward pure-JAX version of the same simplified forward pass, using the same
    precision policy as the kernel (bf16 matmul operands, f32 accumulation & elementwise)."""
    wfe, bfe, wlin, blin, whead, bhead = params
    bf16 = jnp.bfloat16
    f32 = jnp.float32

    feat = jnp.einsum("bsf,fd->bsd", fmri.astype(bf16), wfe.astype(bf16),
                      preferred_element_type=f32) + bfe                       # (B,S,D)
    f1 = jnp.einsum("bsd,de->bse", feat.astype(bf16), wlin.astype(bf16),
                    preferred_element_type=f32) + blin                        # (B,S,D)
    tx = text[1]                                                              # (T,D)
    fn = jnp.maximum(jnp.linalg.norm(f1, axis=-1, keepdims=True), EPS)
    tn = jnp.maximum(jnp.linalg.norm(tx, axis=-1, keepdims=True), EPS)
    sim = jnp.einsum("bsd,td->bst", (f1 / fn).astype(bf16), (tx / tn).astype(bf16),
                     preferred_element_type=f32)                              # (B,S,T)
    e = jnp.exp(sim)
    ns = e / jnp.sum(e, axis=1, keepdims=True)
    feat_mix = jnp.einsum("bst,bsd->btd", ns.astype(bf16), feat.astype(bf16),
                          preferred_element_type=f32)                         # (B,T,D)
    tx_b = jnp.broadcast_to(tx, (fmri.shape[0],) + tx.shape)
    comb = jnp.concatenate([feat_mix, tx_b], axis=-1)                         # (B,T,2D)
    pred = jnp.einsum("btc,cn->btn", comb.astype(bf16), whead.astype(bf16),
                      preferred_element_type=f32) + bhead                     # (B,T,28)
    return pred


if __name__ == "__main__":
    B, S, T = 2, 8, 8

    key = jax.random.PRNGKey(0)
    k = jax.random.split(key, 8)

    fmri = jax.random.normal(k[0], (B, S, F_IN), jnp.float32)
    text = jax.random.normal(k[1], (2, T, D), jnp.float32)

    # deterministic synthetic parameters (scaled ~ 1/sqrt(fan_in))
    wfe   = jax.random.normal(k[2], (F_IN, D), jnp.float32) / np.sqrt(F_IN)
    bfe   = jax.random.normal(k[3], (1, D), jnp.float32) * 0.01
    wlin  = jax.random.normal(k[4], (D, D), jnp.float32) / np.sqrt(D)
    blin  = jax.random.normal(k[5], (1, D), jnp.float32) * 0.01
    whead = jax.random.normal(k[6], (2 * D, NUM_TASKS), jnp.float32) / np.sqrt(2 * D)
    bhead = jax.random.normal(k[7], (1, NUM_TASKS), jnp.float32) * 0.01
    params = (wfe, bfe, wlin, blin, whead, bhead)

    prediction, regress_para = jax.jit(combined_model_sink333)(fmri, text, params)
    prediction = jax.block_until_ready(prediction)

    ref = _reference(fmri, text, params)
    np.testing.assert_allclose(np.asarray(prediction), np.asarray(ref),
                               rtol=2e-3, atol=2e-3)

    print("KERNEL_OK")
</pallas_src>

<mosaic_0001>
module attributes {stable_mosaic.version = 11 : i64} {
  func.func @_combined_kernel(%arg0: i32, %arg1: memref<16x384xf32, #tpu.memory_space<vmem>>, %arg2: memref<8x512xbf16, #tpu.memory_space<vmem>>, %arg3: memref<8x128xf32, #tpu.memory_space<vmem>>, %arg4: memref<384x512xbf16, #tpu.memory_space<vmem>>, %arg5: memref<1x512xf32, #tpu.memory_space<vmem>>, %arg6: memref<512x512xbf16, #tpu.memory_space<vmem>>, %arg7: memref<1x512xf32, #tpu.memory_space<vmem>>, %arg8: memref<512x128xbf16, #tpu.memory_space<vmem>>, %arg9: memref<2x8x128xf32, #tpu.memory_space<vmem>>) attributes {dimension_semantics = [#tpu.dimension_semantics<parallel>], iteration_bounds = array<i64: 1>, scalar_prefetch = 0 : i64, scratch_operands = 0 : i64, tpu.core_type = #tpu.core_type<tc>, window_params = [{transform_indices = @transform_0, window_bounds = array<i64: 16, 384>}, {pipeline_mode = #tpu.pipeline_mode<synchronous>, transform_indices = @transform_1, window_bounds = array<i64: 8, 512>}, {pipeline_mode = #tpu.pipeline_mode<synchronous>, transform_indices = @transform_2, window_bounds = array<i64: 8, 128>}, {pipeline_mode = #tpu.pipeline_mode<synchronous>, transform_indices = @transform_3, window_bounds = array<i64: 384, 512>}, {pipeline_mode = #tpu.pipeline_mode<synchronous>, transform_indices = @transform_4, window_bounds = array<i64: 1, 512>}, {pipeline_mode = #tpu.pipeline_mode<synchronous>, transform_indices = @transform_5, window_bounds = array<i64: 512, 512>}, {pipeline_mode = #tpu.pipeline_mode<synchronous>, transform_indices = @transform_6, window_bounds = array<i64: 1, 512>}, {pipeline_mode = #tpu.pipeline_mode<synchronous>, transform_indices = @transform_7, window_bounds = array<i64: 512, 128>}, {transform_indices = @transform_8, window_bounds = array<i64: 2, 8, 128>}]} {
    %c0 = arith.constant 0 : index
    %c0_0 = arith.constant 0 : index
    %0 = vector.load %arg1[%c0, %c0_0] : memref<16x384xf32, #tpu.memory_space<vmem>>, vector<16x384xf32>
    %1 = arith.truncf %0 : vector<16x384xf32> to vector<16x384xbf16>
    %c0_1 = arith.constant 0 : index
    %c0_2 = arith.constant 0 : index
    %2 = vector.load %arg4[%c0_1, %c0_2] : memref<384x512xbf16, #tpu.memory_space<vmem>>, vector<384x512xbf16>
    %cst = arith.constant dense<0.000000e+00> : vector<16x512xf32>
    %3 = tpu.matmul %1, %2, %cst {dimension_numbers = #tpu.dot_dimension_numbers<[1], [0], [0], [1], [0, 0, 1, 1], [], []>} : vector<16x384xbf16>, vector<384x512xbf16>, vector<16x512xf32> -> vector<16x512xf32>
    %c0_3 = arith.constant 0 : index
    %c0_4 = arith.constant 0 : index
    %4 = vector.load %arg5[%c0_3, %c0_4] : memref<1x512xf32, #tpu.memory_space<vmem>>, vector<1x512xf32>
    %5 = vector.broadcast %4 : vector<1x512xf32> to vector<16x512xf32>
    %6 = arith.addf %3, %5 : vector<16x512xf32>
    %7 = arith.truncf %6 : vector<16x512xf32> to vector<16x512xbf16>
    %c0_5 = arith.constant 0 : index
    %c0_6 = arith.constant 0 : index
    %8 = vector.load %arg6[%c0_5, %c0_6] : memref<512x512xbf16, #tpu.memory_space<vmem>>, vector<512x512xbf16>
    %cst_7 = arith.constant dense<0.000000e+00> : vector<16x512xf32>
    %9 = tpu.matmul %7, %8, %cst_7 {dimension_numbers = #tpu.dot_dimension_numbers<[1], [0], [0], [1], [0, 0, 1, 1], [], []>} : vector<16x512xbf16>, vector<512x512xbf16>, vector<16x512xf32> -> vector<16x512xf32>
    %c0_8 = arith.constant 0 : index
    %c0_9 = arith.constant 0 : index
    %10 = vector.load %arg7[%c0_8, %c0_9] : memref<1x512xf32, #tpu.memory_space<vmem>>, vector<1x512xf32>
    %11 = vector.broadcast %10 : vector<1x512xf32> to vector<16x512xf32>
    %12 = arith.addf %9, %11 : vector<16x512xf32>
    %13 = arith.mulf %12, %12 : vector<16x512xf32>
    %cst_10 = arith.constant dense<0.000000e+00> : vector<16xf32>
    %14 = vector.multi_reduction <add>, %13, %cst_10 [1] : vector<16x512xf32> to vector<16xf32>
    %15 = vector.shape_cast %14 : vector<16xf32> to vector<16x1xf32>
    %cst_11 = arith.constant 1.000000e-16 : f32
    %16 = vector.broadcast %cst_11 : f32 to vector<16x1xf32>
    %17 = arith.maximumf %15, %16 : vector<16x1xf32>
    %18 = math.rsqrt %17 : vector<16x1xf32>
    %19 = vector.broadcast %18 : vector<16x1xf32> to vector<16x512xf32>
    %20 = arith.mulf %12, %19 : vector<16x512xf32>
    %c0_12 = arith.constant 0 : index
    %c0_13 = arith.constant 0 : index
    %21 = vector.load %arg2[%c0_12, %c0_13] : memref<8x512xbf16, #tpu.memory_space<vmem>>, vector<8x512xbf16>
    %22 = vector.extract_strided_slice %20 {offsets = [0, 0], sizes = [8, 512], strides = [1, 1]} : vector<16x512xf32> to vector<8x512xf32>
    %23 = arith.truncf %22 : vector<8x512xf32> to vector<8x512xbf16>
    %24 = vector.extract_strided_slice %6 {offsets = [0, 0], sizes = [8, 512], strides = [1, 1]} : vector<16x512xf32> to vector<8x512xf32>
    %25 = arith.truncf %24 : vector<8x512xf32> to vector<8x512xbf16>
    %cst_14 = arith.constant dense<0.000000e+00> : vector<8x8xf32>
    %26 = tpu.matmul %21, %23, %cst_14 {dimension_numbers = #tpu.dot_dimension_numbers<[1], [1], [0], [0], [0, 0, 1, 0], [], []>} : vector<8x512xbf16>, vector<8x512xbf16>, vector<8x8xf32> -> vector<8x8xf32>
    %27 = math.exp %26 : vector<8x8xf32>
    %cst_15 = arith.constant dense<0.000000e+00> : vector<8xf32>
    %28 = vector.multi_reduction <add>, %27, %cst_15 [1] : vector<8x8xf32> to vector<8xf32>
    %29 = vector.shape_cast %28 : vector<8xf32> to vector<8x1xf32>
    %30 = vector.broadcast %29 : vector<8x1xf32> to vector<8x8xf32>
    %31 = arith.divf %27, %30 : vector<8x8xf32>
    %32 = arith.truncf %31 : vector<8x8xf32> to vector<8x8xbf16>
    %cst_16 = arith.constant dense<0.000000e+00> : vector<8x512xf32>
    %33 = tpu.matmul %32, %25, %cst_16 {dimension_numbers = #tpu.dot_dimension_numbers<[1], [0], [0], [1], [0, 0, 1, 1], [], []>} : vector<8x8xbf16>, vector<8x512xbf16>, vector<8x512xf32> -> vector<8x512xf32>
    %34 = vector.extract_strided_slice %20 {offsets = [8, 0], sizes = [8, 512], strides = [1, 1]} : vector<16x512xf32> to vector<8x512xf32>
    %35 = arith.truncf %34 : vector<8x512xf32> to vector<8x512xbf16>
    %36 = vector.extract_strided_slice %6 {offsets = [8, 0], sizes = [8, 512], strides = [1, 1]} : vector<16x512xf32> to vector<8x512xf32>
    %37 = arith.truncf %36 : vector<8x512xf32> to vector<8x512xbf16>
    %cst_17 = arith.constant dense<0.000000e+00> : vector<8x8xf32>
    %38 = tpu.matmul %21, %35, %cst_17 {dimension_numbers = #tpu.dot_dimension_numbers<[1], [1], [0], [0], [0, 0, 1, 0], [], []>} : vector<8x512xbf16>, vector<8x512xbf16>, vector<8x8xf32> -> vector<8x8xf32>
    %39 = math.exp %38 : vector<8x8xf32>
    %cst_18 = arith.constant dense<0.000000e+00> : vector<8xf32>
    %40 = vector.multi_reduction <add>, %39, %cst_18 [1] : vector<8x8xf32> to vector<8xf32>
    %41 = vector.shape_cast %40 : vector<8xf32> to vector<8x1xf32>
    %42 = vector.broadcast %41 : vector<8x1xf32> to vector<8x8xf32>
    %43 = arith.divf %39, %42 : vector<8x8xf32>
    %44 = arith.truncf %43 : vector<8x8xf32> to vector<8x8xbf16>
    %cst_19 = arith.constant dense<0.000000e+00> : vector<8x512xf32>
    %45 = tpu.matmul %44, %37, %cst_19 {dimension_numbers = #tpu.dot_dimension_numbers<[1], [0], [0], [1], [0, 0, 1, 1], [], []>} : vector<8x8xbf16>, vector<8x512xbf16>, vector<8x512xf32> -> vector<8x512xf32>
    %46 = tpu.concatenate %33, %45 in 0 : vector<8x512xf32>, vector<8x512xf32> -> vector<16x512xf32>
    %47 = arith.truncf %46 : vector<16x512xf32> to vector<16x512xbf16>
    %c0_20 = arith.constant 0 : index
    %c0_21 = arith.constant 0 : index
    %48 = vector.load %arg8[%c0_20, %c0_21] : memref<512x128xbf16, #tpu.memory_space<vmem>>, vector<512x128xbf16>
    %cst_22 = arith.constant dense<0.000000e+00> : vector<16x128xf32>
    %49 = tpu.matmul %47, %48, %cst_22 {dimension_numbers = #tpu.dot_dimension_numbers<[1], [0], [0], [1], [0, 0, 1, 1], [], []>} : vector<16x512xbf16>, vector<512x128xbf16>, vector<16x128xf32> -> vector<16x128xf32>
    %50 = vector.shape_cast %49 : vector<16x128xf32> to vector<2x8x128xf32>
    %c0_23 = arith.constant 0 : index
    %c0_24 = arith.constant 0 : index
    %51 = vector.load %arg3[%c0_23, %c0_24] : memref<8x128xf32, #tpu.memory_space<vmem>>, vector<8x128xf32>
    %52 = vector.shape_cast %51 : vector<8x128xf32> to vector<1x8x128xf32>
    %53 = vector.broadcast %52 : vector<1x8x128xf32> to vector<2x8x128xf32>
    %54 = arith.addf %50, %53 : vector<2x8x128xf32>
    %c0_25 = arith.constant 0 : index
    %c0_26 = arith.constant 0 : index
    %c0_27 = arith.constant 0 : index
    %55 = vector.load %arg9[%c0_25, %c0_26, %c0_27] : memref<2x8x128xf32, #tpu.memory_space<vmem>>, vector<2x8x128xf32>
    tpu.vector_store %arg9[%c0_25, %c0_26, %c0_27], %54 {strides = array<i32>} : memref<2x8x128xf32, #tpu.memory_space<vmem>>, vector<2x8x128xf32>,
    return
  }
  func.func @transform_0(%arg0: i32) -> (i32, i32) {
    %c0_i32 = arith.constant 0 : i32
    %c0_i32_0 = arith.constant 0 : i32
    return %arg0, %c0_i32 : i32, i32
  }
  func.func @transform_1(%arg0: i32) -> (i32, i32) {
    %c0_i32 = arith.constant 0 : i32
    %c0_i32_0 = arith.constant 0 : i32
    %c0_i32_1 = arith.constant 0 : i32
    return %c0_i32, %c0_i32_0 : i32, i32
  }
  func.func @transform_2(%arg0: i32) -> (i32, i32) {
    %c0_i32 = arith.constant 0 : i32
    %c0_i32_0 = arith.constant 0 : i32
    %c0_i32_1 = arith.constant 0 : i32
    return %c0_i32, %c0_i32_0 : i32, i32
  }
  func.func @transform_3(%arg0: i32) -> (i32, i32) {
    %c0_i32 = arith.constant 0 : i32
    %c0_i32_0 = arith.constant 0 : i32
    %c0_i32_1 = arith.constant 0 : i32
    return %c0_i32, %c0_i32_0 : i32, i32
  }
  func.func @transform_4(%arg0: i32) -> (i32, i32) {
    %c0_i32 = arith.constant 0 : i32
    %c0_i32_0 = arith.constant 0 : i32
    %c0_i32_1 = arith.constant 0 : i32
    return %c0_i32, %c0_i32_0 : i32, i32
  }
  func.func @transform_5(%arg0: i32) -> (i32, i32) {
    %c0_i32 = arith.constant 0 : i32
    %c0_i32_0 = arith.constant 0 : i32
    %c0_i32_1 = arith.constant 0 : i32
    return %c0_i32, %c0_i32_0 : i32, i32
  }
  func.func @transform_6(%arg0: i32) -> (i32, i32) {
    %c0_i32 = arith.constant 0 : i32
    %c0_i32_0 = arith.constant 0 : i32
    %c0_i32_1 = arith.constant 0 : i32
    return %c0_i32, %c0_i32_0 : i32, i32
  }
  func.func @transform_7(%arg0: i32) -> (i32, i32) {
    %c0_i32 = arith.constant 0 : i32
    %c0_i32_0 = arith.constant 0 : i32
    %c0_i32_1 = arith.constant 0 : i32
    return %c0_i32, %c0_i32_0 : i32, i32
  }
  func.func @transform_8(%arg0: i32) -> (i32, i32, i32) {
    %c0_i32 = arith.constant 0 : i32
    %c0_i32_0 = arith.constant 0 : i32
    %c0_i32_1 = arith.constant 0 : i32
    return %arg0, %c0_i32, %c0_i32_0 : i32, i32, i32
  }
}

</mosaic_0001>

<llo_original>
// kernel: combined_model_sink333.1
$region0: #{combined_model_sink333.1}
  #allocation0 [shape = 'u32[]', space=smem, size = 0x4, offset = 0x4, fixed_abs, tag = 'smem constant byte address 0x4 - core index']
  #allocation1 [shape = 'u32[72,128]{1,0:T(1,128)}', space=vmem, size = 0x9000, scoped, tag = 'internal scratch']
  %s0 = inlined_call_operand.vmem [shape: f32[16,384], index: 0, kind: input, shape index: {}]
  %s1 = inlined_call_operand.vmem [shape: bf16[8,512], index: 1, kind: input, shape index: {}]
  %s2 = inlined_call_operand.vmem [shape: f32[8,128], index: 2, kind: input, shape index: {}]
  %s3 = inlined_call_operand.vmem [shape: bf16[384,512], index: 3, kind: input, shape index: {}]
  %s4 = inlined_call_operand.vmem [shape: f32[1,512], index: 4, kind: input, shape index: {}]
  %s5 = inlined_call_operand.vmem [shape: bf16[512,512], index: 5, kind: input, shape index: {}]
  %s6 = inlined_call_operand.vmem [shape: f32[1,512], index: 6, kind: input, shape index: {}]
  %s7 = inlined_call_operand.vmem [shape: bf16[512,128], index: 7, kind: input, shape index: {}]
  %s8 = inlined_call_operand.hbm [shape: f32[2,8,128], index: 8, kind: output, shape index: {}]
  %s9 = sld [smem:[#allocation0]]
  $region42: #{combined_model_sink333.1} parent=0
    _
  %s11 = ssub.s32 1, %s9
  %s12 = scalar_select 0, %s11, %s9
  $region1: #{combined_model_sink333.1} parent=0
    #allocation2 [shape = 'u8[8192]{0}', space=vmem, size = 0x2000, scoped, tag = 'output window, operand 0, single buffered']
    #allocation3 [shape = 's32[1]{0}', space=sflag, size = 0x4, scoped, tag = 'scoped memory for combined_model_sink333.1']
    %13 = vsyncpa [#allocation3], 0
    // Predicated region
    $region2: #{combined_model_sink333.1} parent=1 // pred_check
      _
    $region3: #{combined_model_sink333.1} parent=1 // pred_check_branch
      %15 = sbr.rel (0) target = $region5
    $region4: #{combined_model_sink333.1} parent=1 // pred_region
      _
    $region5: #{combined_model_sink333.1} parent=1 // pred_fallthru
      _
    // Predicated region
    $region6: #{combined_model_sink333.1} parent=1 // pred_check
      _
    $region7: #{combined_model_sink333.1} parent=1 // pred_check_branch
      %17 = sbr.rel (0) target = $region9
    $region8: #{combined_model_sink333.1} parent=1 // pred_region
      _
    $region9: #{combined_model_sink333.1} parent=1 // pred_fallthru
      _
    // Predicated region
    $region10: #{combined_model_sink333.1} parent=1 // pred_check
      _
    $region11: #{combined_model_sink333.1} parent=1 // pred_check_branch
      %19 = sbr.rel (0) target = $region13
    $region12: #{combined_model_sink333.1} parent=1 // pred_region
      _
    $region13: #{combined_model_sink333.1} parent=1 // pred_fallthru
      _
    // Predicated region
    $region14: #{combined_model_sink333.1} parent=1 // pred_check
      _
    $region15: #{combined_model_sink333.1} parent=1 // pred_check_branch
      %21 = sbr.rel (0) target = $region17
    $region16: #{combined_model_sink333.1} parent=1 // pred_region
      _
    $region17: #{combined_model_sink333.1} parent=1 // pred_fallthru
      _
    // Predicated region
    $region18: #{combined_model_sink333.1} parent=1 // pred_check
      _
    $region19: #{combined_model_sink333.1} parent=1 // pred_check_branch
      %23 = sbr.rel (0) target = $region21
    $region20: #{combined_model_sink333.1} parent=1 // pred_region
      _
    $region21: #{combined_model_sink333.1} parent=1 // pred_fallthru
      _
    // Predicated region
    $region22: #{combined_model_sink333.1} parent=1 // pred_check
      _
    $region23: #{combined_model_sink333.1} parent=1 // pred_check_branch
      %25 = sbr.rel (0) target = $region25
    $region24: #{combined_model_sink333.1} parent=1 // pred_region
      _
    $region25: #{combined_model_sink333.1} parent=1 // pred_fallthru
      _
    // Predicated region
    $region26: #{combined_model_sink333.1} parent=1 // pred_check
      _
    $region27: #{combined_model_sink333.1} parent=1 // pred_check_branch
      %27 = sbr.rel (0) target = $region29
    $region28: #{combined_model_sink333.1} parent=1 // pred_region
      _
    $region29: #{combined_model_sink333.1} parent=1 // pred_fallthru
      _
    // Predicated region
    $region30: #{combined_model_sink333.1} parent=1 // pred_check
      _
    $region31: #{combined_model_sink333.1} parent=1 // pred_check_branch
      %29 = sbr.rel (0) target = $region33
    $region32: #{combined_model_sink333.1} parent=1 // pred_region
      _
    $region33: #{combined_model_sink333.1} parent=1 // pred_fallthru
      _
    %v31 = vld [vmem:[%s0] sm:$0xff]
    %v32 = vld [vmem:[%s0 + $0x8] sm:$0xff]
    %v33 = vld [vmem:[%s0 + $0x10] sm:$0xff]
    %v34 = vld [vmem:[%s0 + $0x18] sm:$0xff]
    %v35 = vld [vmem:[%s0 + $0x20] sm:$0xff]
    %v36 = vld [vmem:[%s0 + $0x28] sm:$0xff]
    %v37 = vpack.c.bf16 %v34, %v31
    %v38 = vpack.c.bf16 %v35, %v32
    %v39 = vpack.c.bf16 %v36, %v33
    %v40 = vld [vmem:[%s3] sm:$0xff]
    %v41 = vld [vmem:[%s3 + $0x8] sm:$0xff]
    %v42 = vld [vmem:[%s3 + $0x10] sm:$0xff]
    %v43 = vld [vmem:[%s3 + $0x18] sm:$0xff]
    %v44 = vld [vmem:[%s3 + $0x20] sm:$0xff]
    %v45 = vld [vmem:[%s3 + $0x28] sm:$0xff]
    %v46 = vld [vmem:[%s3 + $0x30] sm:$0xff]
    %v47 = vld [vmem:[%s3 + $0x38] sm:$0xff]
    %v48 = vld [vmem:[%s3 + $0x40] sm:$0xff]
    %v49 = vld [vmem:[%s3 + $0x48] sm:$0xff]
    %v50 = vld [vmem:[%s3 + $0x50] sm:$0xff]
    %v51 = vld [vmem:[%s3 + $0x58] sm:$0xff]
    %v52 = vld [vmem:[%s3 + $0x60] sm:$0xff]
    %v53 = vld [vmem:[%s3 + $0x68] sm:$0xff]
    %v54 = vld [vmem:[%s3 + $0x70] sm:$0xff]
    %v55 = vld [vmem:[%s3 + $0x78] sm:$0xff]
    %v56 = vld [vmem:[%s3 + $0x80] sm:$0xff]
    %v57 = vld [vmem:[%s3 + $0x88] sm:$0xff]
    %v58 = vld [vmem:[%s3 + $0x90] sm:$0xff]
    %v59 = vld [vmem:[%s3 + $0x98] sm:$0xff]
    %v60 = vld [vmem:[%s3 + $0xa0] sm:$0xff]
    %v61 = vld [vmem:[%s3 + $0xa8] sm:$0xff]
    %v62 = vld [vmem:[%s3 + $0xb0] sm:$0xff]
    %v63 = vld [vmem:[%s3 + $0xb8] sm:$0xff]
    %v64 = vld [vmem:[%s3 + $0xc0] sm:$0xff]
    %v65 = vld [vmem:[%s3 + $0xc8] sm:$0xff]
    %v66 = vld [vmem:[%s3 + $0xd0] sm:$0xff]
    %v67 = vld [vmem:[%s3 + $0xd8] sm:$0xff]
    %v68 = vld [vmem:[%s3 + $0xe0] sm:$0xff]
    %v69 = vld [vmem:[%s3 + $0xe8] sm:$0xff]
    %v70 = vld [vmem:[%s3 + $0xf0] sm:$0xff]
    %v71 = vld [vmem:[%s3 + $0xf8] sm:$0xff]
    %v72 = vld [vmem:[%s3 + $0x100] sm:$0xff]
    %v73 = vld [vmem:[%s3 + $0x108] sm:$0xff]
    %v74 = vld [vmem:[%s3 + $0x110] sm:$0xff]
    %v75 = vld [vmem:[%s3 + $0x118] sm:$0xff]
    %v76 = vld [vmem:[%s3 + $0x120] sm:$0xff]
    %v77 = vld [vmem:[%s3 + $0x128] sm:$0xff]
    %v78 = vld [vmem:[%s3 + $0x130] sm:$0xff]
    %v79 = vld [vmem:[%s3 + $0x138] sm:$0xff]
    %v80 = vld [vmem:[%s3 + $0x140] sm:$0xff]
    %v81 = vld [vmem:[%s3 + $0x148] sm:$0xff]
    %v82 = vld [vmem:[%s3 + $0x150] sm:$0xff]
    %v83 = vld [vmem:[%s3 + $0x158] sm:$0xff]
    %v84 = vld [vmem:[%s3 + $0x160] sm:$0xff]
    %v85 = vld [vmem:[%s3 + $0x168] sm:$0xff]
    %v86 = vld [vmem:[%s3 + $0x170] sm:$0xff]
    %v87 = vld [vmem:[%s3 + $0x178] sm:$0xff]
    %v88 = vld [vmem:[%s3 + $0x180] sm:$0xff]
    %v89 = vld [vmem:[%s3 + $0x188] sm:$0xff]
    %v90 = vld [vmem:[%s3 + $0x190] sm:$0xff]
    %v91 = vld [vmem:[%s3 + $0x198] sm:$0xff]
    %v92 = vld [vmem:[%s3 + $0x1a0] sm:$0xff]
    %v93 = vld [vmem:[%s3 + $0x1a8] sm:$0xff]
    %v94 = vld [vmem:[%s3 + $0x1b0] sm:$0xff]
    %v95 = vld [vmem:[%s3 + $0x1b8] sm:$0xff]
    %v96 = vld [vmem:[%s3 + $0x1c0] sm:$0xff]
    %v97 = vld [vmem:[%s3 + $0x1c8] sm:$0xff]
    %v98 = vld [vmem:[%s3 + $0x1d0] sm:$0xff]
    %v99 = vld [vmem:[%s3 + $0x1d8] sm:$0xff]
    %v100 = vld [vmem:[%s3 + $0x1e0] sm:$0xff]
    %v101 = vld [vmem:[%s3 + $0x1e8] sm:$0xff]
    %v102 = vld [vmem:[%s3 + $0x1f0] sm:$0xff]
    %v103 = vld [vmem:[%s3 + $0x1f8] sm:$0xff]
    %v104 = vld [vmem:[%s3 + $0x200] sm:$0xff]
    %v105 = vld [vmem:[%s3 + $0x208] sm:$0xff]
    %v106 = vld [vmem:[%s3 + $0x210] sm:$0xff]
    %v107 = vld [vmem:[%s3 + $0x218] sm:$0xff]
    %v108 = vld [vmem:[%s3 + $0x220] sm:$0xff]
    %v109 = vld [vmem:[%s3 + $0x228] sm:$0xff]
    %v110 = vld [vmem:[%s3 + $0x230] sm:$0xff]
    %v111 = vld [vmem:[%s3 + $0x238] sm:$0xff]
    %v112 = vld [vmem:[%s3 + $0x240] sm:$0xff]
    %v113 = vld [vmem:[%s3 + $0x248] sm:$0xff]
    %v114 = vld [vmem:[%s3 + $0x250] sm:$0xff]
    %v115 = vld [vmem:[%s3 + $0x258] sm:$0xff]
    %v116 = vld [vmem:[%s3 + $0x260] sm:$0xff]
    %v117 = vld [vmem:[%s3 + $0x268] sm:$0xff]
    %v118 = vld [vmem:[%s3 + $0x270] sm:$0xff]
    %v119 = vld [vmem:[%s3 + $0x278] sm:$0xff]
    %v120 = vld [vmem:[%s3 + $0x280] sm:$0xff]
    %v121 = vld [vmem:[%s3 + $0x288] sm:$0xff]
    %v122 = vld [vmem:[%s3 + $0x290] sm:$0xff]
    %v123 = vld [vmem:[%s3 + $0x298] sm:$0xff]
    %v124 = vld [vmem:[%s3 + $0x2a0] sm:$0xff]
    %v125 = vld [vmem:[%s3 + $0x2a8] sm:$0xff]
    %v126 = vld [vmem:[%s3 + $0x2b0] sm:$0xff]
    %v127 = vld [vmem:[%s3 + $0x2b8] sm:$0xff]
    %v128 = vld [vmem:[%s3 + $0x2c0] sm:$0xff]
    %v129 = vld [vmem:[%s3 + $0x2c8] sm:$0xff]
    %v130 = vld [vmem:[%s3 + $0x2d0] sm:$0xff]
    %v131 = vld [vmem:[%s3 + $0x2d8] sm:$0xff]
    %v132 = vld [vmem:[%s3 + $0x2e0] sm:$0xff]
    %v133 = vld [vmem:[%s3 + $0x2e8] sm:$0xff]
    %v134 = vld [vmem:[%s3 + $0x2f0] sm:$0xff]
    %v135 = vld [vmem:[%s3 + $0x2f8] sm:$0xff]
    %v136 = vld [vmem:[%s4] sm:$0xf]
    %v138 = vperm.slane %v136, 0
    %v139 = vperm.slane %v136, 1
    %v140 = vperm.slane %v136, 2
    %v141 = vperm.slane %v136, 3
    %v242 = vunpack.c.l.b16 %v40
    %v243 = vunpack.c.h.b16 %v40
    %v244 = vunpack.c.l.b16 %v41
    %v245 = vunpack.c.h.b16 %v41
    %v246 = vunpack.c.l.b16 %v42
    %v247 = vunpack.c.h.b16 %v42
    %v248 = vunpack.c.l.b16 %v43
    %v249 = vunpack.c.h.b16 %v43
    %v250 = vunpack.c.l.b16 %v44
    %v251 = vunpack.c.h.b16 %v44
    %v252 = vunpack.c.l.b16 %v45
    %v253 = vunpack.c.h.b16 %v45
    %v254 = vunpack.c.l.b16 %v46
    %v255 = vunpack.c.h.b16 %v46
    %v256 = vunpack.c.l.b16 %v47
    %v257 = vunpack.c.h.b16 %v47
    %v258 = vunpack.c.l.b16 %v48
    %v259 = vunpack.c.h.b16 %v48
    %v260 = vunpack.c.l.b16 %v49
    %v261 = vunpack.c.h.b16 %v49
    %v262 = vunpack.c.l.b16 %v50
    %v263 = vunpack.c.h.b16 %v50
    %v264 = vunpack.c.l.b16 %v51
    %v265 = vunpack.c.h.b16 %v51
    %v266 = vunpack.c.l.b16 %v52
    %v267 = vunpack.c.h.b16 %v52
    %v268 = vunpack.c.l.b16 %v53
    %v269 = vunpack.c.h.b16 %v53
    %v270 = vunpack.c.l.b16 %v54
    %v271 = vunpack.c.h.b16 %v54
    %v272 = vunpack.c.l.b16 %v55
    %v273 = vunpack.c.h.b16 %v55
    %v274 = vunpack.c.l.b16 %v56
    %v275 = vunpack.c.h.b16 %v56
    %v276 = vunpack.c.l.b16 %v57
    %v277 = vunpack.c.h.b16 %v57
    %v278 = vunpack.c.l.b16 %v58
    %v279 = vunpack.c.h.b16 %v58
    %v280 = vunpack.c.l.b16 %v59
    %v281 = vunpack.c.h.b16 %v59
    %v282 = vunpack.c.l.b16 %v60
    %v283 = vunpack.c.h.b16 %v60
    %v284 = vunpack.c.l.b16 %v61
    %v285 = vunpack.c.h.b16 %v61
    %v286 = vunpack.c.l.b16 %v62
    %v287 = vunpack.c.h.b16 %v62
    %v288 = vunpack.c.l.b16 %v63
    %v289 = vunpack.c.h.b16 %v63
    %v290 = vunpack.c.l.b16 %v64
    %v291 = vunpack.c.h.b16 %v64
    %v292 = vunpack.c.l.b16 %v65
    %v293 = vunpack.c.h.b16 %v65
    %v294 = vunpack.c.l.b16 %v66
    %v295 = vunpack.c.h.b16 %v66
    %v296 = vunpack.c.l.b16 %v67
    %v297 = vunpack.c.h.b16 %v67
    %v298 = vunpack.c.l.b16 %v68
    %v299 = vunpack.c.h.b16 %v68
    %v300 = vunpack.c.l.b16 %v69
    %v301 = vunpack.c.h.b16 %v69
    %v302 = vunpack.c.l.b16 %v70
    %v303 = vunpack.c.h.b16 %v70
    %v304 = vunpack.c.l.b16 %v71
    %v305 = vunpack.c.h.b16 %v71
    %v306 = vunpack.c.l.b16 %v72
    %v307 = vunpack.c.h.b16 %v72
    %v308 = vunpack.c.l.b16 %v73
    %v309 = vunpack.c.h.b16 %v73
    %v310 = vunpack.c.l.b16 %v74
    %v311 = vunpack.c.h.b16 %v74
    %v312 = vunpack.c.l.b16 %v75
    %v313 = vunpack.c.h.b16 %v75
    %v314 = vunpack.c.l.b16 %v76
    %v315 = vunpack.c.h.b16 %v76
    %v316 = vunpack.c.l.b16 %v77
    %v317 = vunpack.c.h.b16 %v77
    %v318 = vunpack.c.l.b16 %v78
    %v319 = vunpack.c.h.b16 %v78
    %v320 = vunpack.c.l.b16 %v79
    %v321 = vunpack.c.h.b16 %v79
    %v322 = vunpack.c.l.b16 %v80
    %v323 = vunpack.c.h.b16 %v80
    %v324 = vunpack.c.l.b16 %v81
    %v325 = vunpack.c.h.b16 %v81
    %v326 = vunpack.c.l.b16 %v82
    %v327 = vunpack.c.h.b16 %v82
    %v328 = vunpack.c.l.b16 %v83
    %v329 = vunpack.c.h.b16 %v83
    %v330 = vunpack.c.l.b16 %v84
    %v331 = vunpack.c.h.b16 %v84
    %v332 = vunpack.c.l.b16 %v85
    %v333 = vunpack.c.h.b16 %v85
    %v334 = vunpack.c.l.b16 %v86
    %v335 = vunpack.c.h.b16 %v86
    %v336 = vunpack.c.l.b16 %v87
    %v337 = vunpack.c.h.b16 %v87
    %v338 = vunpack.c.l.b16 %v88
    %v339 = vunpack.c.h.b16 %v88
    %v340 = vunpack.c.l.b16 %v89
    %v341 = vunpack.c.h.b16 %v89
    %v342 = vunpack.c.l.b16 %v90
    %v343 = vunpack.c.h.b16 %v90
    %v344 = vunpack.c.l.b16 %v91
    %v345 = vunpack.c.h.b16 %v91
    %v346 = vunpack.c.l.b16 %v92
    %v347 = vunpack.c.h.b16 %v92
    %v348 = vunpack.c.l.b16 %v93
    %v349 = vunpack.c.h.b16 %v93
    %v350 = vunpack.c.l.b16 %v94
    %v351 = vunpack.c.h.b16 %v94
    %v352 = vunpack.c.l.b16 %v95
    %v353 = vunpack.c.h.b16 %v95
    %v354 = vunpack.c.l.b16 %v96
    %v355 = vunpack.c.h.b16 %v96
    %v356 = vunpack.c.l.b16 %v97
    %v357 = vunpack.c.h.b16 %v97
    %v358 = vunpack.c.l.b16 %v98
    %v359 = vunpack.c.h.b16 %v98
    %v360 = vunpack.c.l.b16 %v99
    %v361 = vunpack.c.h.b16 %v99
    %v362 = vunpack.c.l.b16 %v100
    %v363 = vunpack.c.h.b16 %v100
    %v364 = vunpack.c.l.b16 %v101
    %v365 = vunpack.c.h.b16 %v101
    %v366 = vunpack.c.l.b16 %v102
    %v367 = vunpack.c.h.b16 %v102
    %v368 = vunpack.c.l.b16 %v103
    %v369 = vunpack.c.h.b16 %v103
    %v370 = vunpack.c.l.b16 %v104
    %v371 = vunpack.c.h.b16 %v104
    %v372 = vunpack.c.l.b16 %v105
    %v373 = vunpack.c.h.b16 %v105
    %v374 = vunpack.c.l.b16 %v106
    %v375 = vunpack.c.h.b16 %v106
    %v376 = vunpack.c.l.b16 %v107
    %v377 = vunpack.c.h.b16 %v107
    %v378 = vunpack.c.l.b16 %v108
    %v379 = vunpack.c.h.b16 %v108
    %v380 = vunpack.c.l.b16 %v109
    %v381 = vunpack.c.h.b16 %v109
    %v382 = vunpack.c.l.b16 %v110
    %v383 = vunpack.c.h.b16 %v110
    %v384 = vunpack.c.l.b16 %v111
    %v385 = vunpack.c.h.b16 %v111
    %v386 = vunpack.c.l.b16 %v112
    %v387 = vunpack.c.h.b16 %v112
    %v388 = vunpack.c.l.b16 %v113
    %v389 = vunpack.c.h.b16 %v113
    %v390 = vunpack.c.l.b16 %v114
    %v391 = vunpack.c.h.b16 %v114
    %v392 = vunpack.c.l.b16 %v115
    %v393 = vunpack.c.h.b16 %v115
    %v394 = vunpack.c.l.b16 %v116
    %v395 = vunpack.c.h.b16 %v116
    %v396 = vunpack.c.l.b16 %v117
    %v397 = vunpack.c.h.b16 %v117
    %v398 = vunpack.c.l.b16 %v118
    %v399 = vunpack.c.h.b16 %v118
    %v400 = vunpack.c.l.b16 %v119
    %v401 = vunpack.c.h.b16 %v119
    %v402 = vunpack.c.l.b16 %v120
    %v403 = vunpack.c.h.b16 %v120
    %v404 = vunpack.c.l.b16 %v121
    %v405 = vunpack.c.h.b16 %v121
    %v406 = vunpack.c.l.b16 %v122
    %v407 = vunpack.c.h.b16 %v122
    %v408 = vunpack.c.l.b16 %v123
    %v409 = vunpack.c.h.b16 %v123
    %v410 = vunpack.c.l.b16 %v124
    %v411 = vunpack.c.h.b16 %v124
    %v412 = vunpack.c.l.b16 %v125
    %v413 = vunpack.c.h.b16 %v125
    %v414 = vunpack.c.l.b16 %v126
    %v415 = vunpack.c.h.b16 %v126
    %v416 = vunpack.c.l.b16 %v127
    %v417 = vunpack.c.h.b16 %v127
    %v418 = vunpack.c.l.b16 %v128
    %v419 = vunpack.c.h.b16 %v128
    %v420 = vunpack.c.l.b16 %v129
    %v421 = vunpack.c.h.b16 %v129
    %v422 = vunpack.c.l.b16 %v130
    %v423 = vunpack.c.h.b16 %v130
    %v424 = vunpack.c.l.b16 %v131
    %v425 = vunpack.c.h.b16 %v131
    %v426 = vunpack.c.l.b16 %v132
    %v427 = vunpack.c.h.b16 %v132
    %v428 = vunpack.c.l.b16 %v133
    %v429 = vunpack.c.h.b16 %v133
    %v430 = vunpack.c.l.b16 %v134
    %v431 = vunpack.c.h.b16 %v134
    %v432 = vunpack.c.l.b16 %v135
    %v433 = vunpack.c.h.b16 %v135
    %v434 = vpack.c.b16 %v246, %v242
    %v435 = vpack.c.b16 %v247, %v243
    %v436 = vpack.c.b16 %v248, %v244
    %v437 = vpack.c.b16 %v249, %v245
    %v438 = vpack.c.b16 %v254, %v250
    %v439 = vpack.c.b16 %v255, %v251
    %v440 = vpack.c.b16 %v256, %v252
    %v441 = vpack.c.b16 %v257, %v253
    %v442 = vpack.c.b16 %v262, %v258
    %v443 = vpack.c.b16 %v263, %v259
    %v444 = vpack.c.b16 %v264, %v260
    %v445 = vpack.c.b16 %v265, %v261
    %v446 = vpack.c.b16 %v270, %v266
    %v447 = vpack.c.b16 %v271, %v267
    %v448 = vpack.c.b16 %v272, %v268
    %v449 = vpack.c.b16 %v273, %v269
    %v450 = vpack.c.b16 %v278, %v274
    %v451 = vpack.c.b16 %v279, %v275
    %v452 = vpack.c.b16 %v280, %v276
    %v453 = vpack.c.b16 %v281, %v277
    %v454 = vpack.c.b16 %v286, %v282
    %v455 = vpack.c.b16 %v287, %v283
    %v456 = vpack.c.b16 %v288, %v284
    %v457 = vpack.c.b16 %v289, %v285
    %v458 = vpack.c.b16 %v294, %v290
    %v459 = vpack.c.b16 %v295, %v291
    %v460 = vpack.c.b16 %v296, %v292
    %v461 = vpack.c.b16 %v297, %v293
    %v462 = vpack.c.b16 %v302, %v298
    %v463 = vpack.c.b16 %v303, %v299
    %v464 = vpack.c.b16 %v304, %v300
    %v465 = vpack.c.b16 %v305, %v301
    %v466 = vpack.c.b16 %v310, %v306
    %v467 = vpack.c.b16 %v311, %v307
    %v468 = vpack.c.b16 %v312, %v308
    %v469 = vpack.c.b16 %v313, %v309
    %v470 = vpack.c.b16 %v318, %v314
    %v471 = vpack.c.b16 %v319, %v315
    %v472 = vpack.c.b16 %v320, %v316
    %v473 = vpack.c.b16 %v321, %v317
    %v474 = vpack.c.b16 %v326, %v322
    %v475 = vpack.c.b16 %v327, %v323
    %v476 = vpack.c.b16 %v328, %v324
    %v477 = vpack.c.b16 %v329, %v325
    %v478 = vpack.c.b16 %v334, %v330
    %v479 = vpack.c.b16 %v335, %v331
    %v480 = vpack.c.b16 %v336, %v332
    %v481 = vpack.c.b16 %v337, %v333
    %v482 = vpack.c.b16 %v342, %v338
    %v483 = vpack.c.b16 %v343, %v339
    %v484 = vpack.c.b16 %v344, %v340
    %v485 = vpack.c.b16 %v345, %v341
    %v486 = vpack.c.b16 %v350, %v346
    %v487 = vpack.c.b16 %v351, %v347
    %v488 = vpack.c.b16 %v352, %v348
    %v489 = vpack.c.b16 %v353, %v349
    %v490 = vpack.c.b16 %v358, %v354
    %v491 = vpack.c.b16 %v359, %v355
    %v492 = vpack.c.b16 %v360, %v356
    %v493 = vpack.c.b16 %v361, %v357
    %v494 = vpack.c.b16 %v366, %v362
    %v495 = vpack.c.b16 %v367, %v363
    %v496 = vpack.c.b16 %v368, %v364
    %v497 = vpack.c.b16 %v369, %v365
    %v498 = vpack.c.b16 %v374, %v370
    %v499 = vpack.c.b16 %v375, %v371
    %v500 = vpack.c.b16 %v376, %v372
    %v501 = vpack.c.b16 %v377, %v373
    %v502 = vpack.c.b16 %v382, %v378
    %v503 = vpack.c.b16 %v383, %v379
    %v504 = vpack.c.b16 %v384, %v380
    %v505 = vpack.c.b16 %v385, %v381
    %v506 = vpack.c.b16 %v390, %v386
    %v507 = vpack.c.b16 %v391, %v387
    %v508 = vpack.c.b16 %v392, %v388
    %v509 = vpack.c.b16 %v393, %v389
    %v510 = vpack.c.b16 %v398, %v394
    %v511 = vpack.c.b16 %v399, %v395
    %v512 = vpack.c.b16 %v400, %v396
    %v513 = vpack.c.b16 %v401, %v397
    %v514 = vpack.c.b16 %v406, %v402
    %v515 = vpack.c.b16 %v407, %v403
    %v516 = vpack.c.b16 %v408, %v404
    %v517 = vpack.c.b16 %v409, %v405
    %v518 = vpack.c.b16 %v414, %v410
    %v519 = vpack.c.b16 %v415, %v411
    %v520 = vpack.c.b16 %v416, %v412
    %v521 = vpack.c.b16 %v417, %v413
    %v522 = vpack.c.b16 %v422, %v418
    %v523 = vpack.c.b16 %v423, %v419
    %v524 = vpack.c.b16 %v424, %v420
    %v525 = vpack.c.b16 %v425, %v421
    %v526 = vpack.c.b16 %v430, %v426
    %v527 = vpack.c.b16 %v431, %v427
    %v528 = vpack.c.b16 %v432, %v428
    %v529 = vpack.c.b16 %v433, %v429
    %626 = vmatpush.bf16.msra.mxu0 %v462
    %627 = vmatpush.bf16.msra.mxu0 %v458
    %628 = vmatpush.bf16.msra.mxu0 %v454
    %629 = vmatpush.bf16.msra.mxu0 %v450
    %630 = vmatpush.bf16.msra.mxu0 %v446
    %631 = vmatpush.bf16.msra.mxu0 %v442
    %632 = vmatpush.bf16.msra.mxu0 %v438
    %633 = vmatpush.bf16.msra.mxu0 %v434
    %634 = vmatmul.bf16.gmra.mxu0 %v37
    %v635 = vpop.f32.mrf.mxu0
    %v636 = vadd.f32 %v138, %v635
    %v637 = vpop.f32.mrf.mxu0
    %v638 = vadd.f32 %v138, %v637
    %639 = vdwg.mxu0
    %640 = vmatpush.bf16.msra.mxu0 %v494
    %641 = vmatpush.bf16.msra.mxu0 %v490
    %642 = vmatpush.bf16.msra.mxu0 %v486
    %643 = vmatpush.bf16.msra.mxu0 %v482
    %644 = vmatpush.bf16.msra.mxu0 %v478
    %645 = vmatpush.bf16.msra.mxu0 %v474
    %646 = vmatpush.bf16.msra.mxu0 %v470
    %647 = vmatpush.bf16.msra.mxu0 %v466
    %648 = vmatmul.bf16.gmra.mxu0 %v38
    %v649 = vpop.f32.mrf.mxu0
    %v650 = vadd.f32 %v636, %v649
    %v651 = vpop.f32.mrf.mxu0
    %v652 = vadd.f32 %v638, %v651
    %653 = vdwg.mxu0
    %654 = vmatpush.bf16.msra.mxu0 %v526
    %655 = vmatpush.bf16.msra.mxu0 %v522
    %656 = vmatpush.bf16.msra.mxu0 %v518
    %657 = vmatpush.bf16.msra.mxu0 %v514
    %658 = vmatpush.bf16.msra.mxu0 %v510
    %659 = vmatpush.bf16.msra.mxu0 %v506
    %660 = vmatpush.bf16.msra.mxu0 %v502
    %661 = vmatpush.bf16.msra.mxu0 %v498
    %662 = vmatmul.bf16.gmra.mxu0 %v39
    %v663 = vpop.f32.mrf.mxu0
    %v664 = vadd.f32 %v650, %v663
    %v665 = vpop.f32.mrf.mxu0
    %v666 = vadd.f32 %v652, %v665
    %667 = vdwg.mxu0
    %668 = vmatpush.bf16.msra.mxu0 %v463
    %669 = vmatpush.bf16.msra.mxu0 %v459
    %670 = vmatpush.bf16.msra.mxu0 %v455
    %671 = vmatpush.bf16.msra.mxu0 %v451
    %672 = vmatpush.bf16.msra.mxu0 %v447
    %673 = vmatpush.bf16.msra.mxu0 %v443
    %674 = vmatpush.bf16.msra.mxu0 %v439
    %675 = vmatpush.bf16.msra.mxu0 %v435
    %676 = vmatmul.bf16.gmra.mxu0 %v37
    %v677 = vpop.f32.mrf.mxu0
    %v678 = vadd.f32 %v139, %v677
    %v679 = vpop.f32.mrf.mxu0
    %v680 = vadd.f32 %v139, %v679
    %681 = vdwg.mxu0
    %682 = vmatpush.bf16.msra.mxu0 %v495
    %683 = vmatpush.bf16.msra.mxu0 %v491
    %684 = vmatpush.bf16.msra.mxu0 %v487
    %685 = vmatpush.bf16.msra.mxu0 %v483
    %686 = vmatpush.bf16.msra.mxu0 %v479
    %687 = vmatpush.bf16.msra.mxu0 %v475
    %688 = vmatpush.bf16.msra.mxu0 %v471
    %689 = vmatpush.bf16.msra.mxu0 %v467
    %690 = vmatmul.bf16.gmra.mxu0 %v38
    %v691 = vpop.f32.mrf.mxu0
    %v692 = vadd.f32 %v678, %v691
    %v693 = vpop.f32.mrf.mxu0
    %v694 = vadd.f32 %v680, %v693
    %695 = vdwg.mxu0
    %696 = vmatpush.bf16.msra.mxu0 %v527
    %697 = vmatpush.bf16.msra.mxu0 %v523
    %698 = vmatpush.bf16.msra.mxu0 %v519
    %699 = vmatpush.bf16.msra.mxu0 %v515
    %700 = vmatpush.bf16.msra.mxu0 %v511
    %701 = vmatpush.bf16.msra.mxu0 %v507
    %702 = vmatpush.bf16.msra.mxu0 %v503
    %703 = vmatpush.bf16.msra.mxu0 %v499
    %704 = vmatmul.bf16.gmra.mxu0 %v39
    %v705 = vpop.f32.mrf.mxu0
    %v706 = vadd.f32 %v692, %v705
    %v707 = vpop.f32.mrf.mxu0
    %v708 = vadd.f32 %v694, %v707
    %709 = vdwg.mxu0
    %710 = vmatpush.bf16.msra.mxu0 %v464
    %711 = vmatpush.bf16.msra.mxu0 %v460
    %712 = vmatpush.bf16.msra.mxu0 %v456
    %713 = vmatpush.bf16.msra.mxu0 %v452
    %714 = vmatpush.bf16.msra.mxu0 %v448
    %715 = vmatpush.bf16.msra.mxu0 %v444
    %716 = vmatpush.bf16.msra.mxu0 %v440
    %717 = vmatpush.bf16.msra.mxu0 %v436
    %718 = vmatmul.bf16.gmra.mxu0 %v37
    %v719 = vpop.f32.mrf.mxu0
    %v720 = vadd.f32 %v140, %v719
    %v721 = vpop.f32.mrf.mxu0
    %v722 = vadd.f32 %v140, %v721
    %723 = vdwg.mxu0
    %724 = vmatpush.bf16.msra.mxu0 %v496
    %725 = vmatpush.bf16.msra.mxu0 %v492
    %726 = vmatpush.bf16.msra.mxu0 %v488
    %727 = vmatpush.bf16.msra.mxu0 %v484
    %728 = vmatpush.bf16.msra.mxu0 %v480
    %729 = vmatpush.bf16.msra.mxu0 %v476
    %730 = vmatpush.bf16.msra.mxu0 %v472
    %731 = vmatpush.bf16.msra.mxu0 %v468
    %732 = vmatmul.bf16.gmra.mxu0 %v38
    %v733 = vpop.f32.mrf.mxu0
    %v734 = vadd.f32 %v720, %v733
    %v735 = vpop.f32.mrf.mxu0
    %v736 = vadd.f32 %v722, %v735
    %737 = vdwg.mxu0
    %738 = vmatpush.bf16.msra.mxu0 %v528
    %739 = vmatpush.bf16.msra.mxu0 %v524
    %740 = vmatpush.bf16.msra.mxu0 %v520
    %741 = vmatpush.bf16.msra.mxu0 %v516
    %742 = vmatpush.bf16.msra.mxu0 %v512
    %743 = vmatpush.bf16.msra.mxu0 %v508
    %744 = vmatpush.bf16.msra.mxu0 %v504
    %745 = vmatpush.bf16.msra.mxu0 %v500
    %746 = vmatmul.bf16.gmra.mxu0 %v39
    %v747 = vpop.f32.mrf.mxu0
    %v748 = vadd.f32 %v734, %v747
    %v749 = vpop.f32.mrf.mxu0
    %v750 = vadd.f32 %v736, %v749
    %751 = vdwg.mxu0
    %752 = vmatpush.bf16.msra.mxu0 %v465
    %753 = vmatpush.bf16.msra.mxu0 %v461
    %754 = vmatpush.bf16.msra.mxu0 %v457
    %755 = vmatpush.bf16.msra.mxu0 %v453
    %756 = vmatpush.bf16.msra.mxu0 %v449
    %757 = vmatpush.bf16.msra.mxu0 %v445
    %758 = vmatpush.bf16.msra.mxu0 %v441
    %759 = vmatpush.bf16.msra.mxu0 %v437
    %760 = vmatmul.bf16.gmra.mxu0 %v37
    %v761 = vpop.f32.mrf.mxu0
    %v762 = vadd.f32 %v141, %v761
    %v763 = vpop.f32.mrf.mxu0
    %v764 = vadd.f32 %v141, %v763
    %765 = vdwg.mxu0
    %766 = vmatpush.bf16.msra.mxu0 %v497
    %767 = vmatpush.bf16.msra.mxu0 %v493
    %768 = vmatpush.bf16.msra.mxu0 %v489
    %769 = vmatpush.bf16.msra.mxu0 %v485
    %770 = vmatpush.bf16.msra.mxu0 %v481
    %771 = vmatpush.bf16.msra.mxu0 %v477
    %772 = vmatpush.bf16.msra.mxu0 %v473
    %773 = vmatpush.bf16.msra.mxu0 %v469
    %774 = vmatmul.bf16.gmra.mxu0 %v38
    %v775 = vpop.f32.mrf.mxu0
    %v776 = vadd.f32 %v762, %v775
    %v777 = vpop.f32.mrf.mxu0
    %v778 = vadd.f32 %v764, %v777
    %779 = vdwg.mxu0
    %780 = vmatpush.bf16.msra.mxu0 %v529
    %781 = vmatpush.bf16.msra.mxu0 %v525
    %782 = vmatpush.bf16.msra.mxu0 %v521
    %783 = vmatpush.bf16.msra.mxu0 %v517
    %784 = vmatpush.bf16.msra.mxu0 %v513
    %785 = vmatpush.bf16.msra.mxu0 %v509
    %786 = vmatpush.bf16.msra.mxu0 %v505
    %787 = vmatpush.bf16.msra.mxu0 %v501
    %788 = vmatmul.bf16.gmra.mxu0 %v39
    %v789 = vpop.f32.mrf.mxu0
    %v790 = vadd.f32 %v776, %v789
    %v791 = vpop.f32.mrf.mxu0
    %v792 = vadd.f32 %v778, %v791
    %793 = vdwg.mxu0
    %v794 = vpack.c.bf16 %v666, %v664
    %v795 = vpack.c.bf16 %v708, %v706
    %v796 = vpack.c.bf16 %v750, %v748
    %v797 = vpack.c.bf16 %v792, %v790
    %v798 = vld [vmem:[%s5] sm:$0xff]
    %v799 = vld [vmem:[%s5 + $0x8] sm:$0xff]
    %v800 = vld [vmem:[%s5 + $0x10] sm:$0xff]
    %v801 = vld [vmem:[%s5 + $0x18] sm:$0xff]
    %v802 = vld [vmem:[%s5 + $0x20] sm:$0xff]
    %v803 = vld [vmem:[%s5 + $0x28] sm:$0xff]
    %v804 = vld [vmem:[%s5 + $0x30] sm:$0xff]
    %v805 = vld [vmem:[%s5 + $0x38] sm:$0xff]
    %v806 = vld [vmem:[%s5 + $0x40] sm:$0xff]
    %v807 = vld [vmem:[%s5 + $0x48] sm:$0xff]
    %v808 = vld [vmem:[%s5 + $0x50] sm:$0xff]
    %v809 = vld [vmem:[%s5 + $0x58] sm:$0xff]
    %v810 = vld [vmem:[%s5 + $0x60] sm:$0xff]
    %v811 = vld [vmem:[%s5 + $0x68] sm:$0xff]
    %v812 = vld [vmem:[%s5 + $0x70] sm:$0xff]
    %v813 = vld [vmem:[%s5 + $0x78] sm:$0xff]
    %v814 = vld [vmem:[%s5 + $0x80] sm:$0xff]
    %v815 = vld [vmem:[%s5 + $0x88] sm:$0xff]
    %v816 = vld [vmem:[%s5 + $0x90] sm:$0xff]
    %v817 = vld [vmem:[%s5 + $0x98] sm:$0xff]
    %v818 = vld [vmem:[%s5 + $0xa0] sm:$0xff]
    %v819 = vld [vmem:[%s5 + $0xa8] sm:$0xff]
    %v820 = vld [vmem:[%s5 + $0xb0] sm:$0xff]
    %v821 = vld [vmem:[%s5 + $0xb8] sm:$0xff]
    %v822 = vld [vmem:[%s5 + $0xc0] sm:$0xff]
    %v823 = vld [vmem:[%s5 + $0xc8] sm:$0xff]
    %v824 = vld [vmem:[%s5 + $0xd0] sm:$0xff]
    %v825 = vld [vmem:[%s5 + $0xd8] sm:$0xff]
    %v826 = vld [vmem:[%s5 + $0xe0] sm:$0xff]
    %v827 = vld [vmem:[%s5 + $0xe8] sm:$0xff]
    %v828 = vld [vmem:[%s5 + $0xf0] sm:$0xff]
    %v829 = vld [vmem:[%s5 + $0xf8] sm:$0xff]
    %v830 = vld [vmem:[%s5 + $0x100] sm:$0xff]
    %v831 = vld [vmem:[%s5 + $0x108] sm:$0xff]
    %v832 = vld [vmem:[%s5 + $0x110] sm:$0xff]
    %v833 = vld [vmem:[%s5 + $0x118] sm:$0xff]
    %v834 = vld [vmem:[%s5 + $0x120] sm:$0xff]
    %v835 = vld [vmem:[%s5 + $0x128] sm:$0xff]
    %v836 = vld [vmem:[%s5 + $0x130] sm:$0xff]
    %v837 = vld [vmem:[%s5 + $0x138] sm:$0xff]
    %v838 = vld [vmem:[%s5 + $0x140] sm:$0xff]
    %v839 = vld [vmem:[%s5 + $0x148] sm:$0xff]
    %v840 = vld [vmem:[%s5 + $0x150] sm:$0xff]
    %v841 = vld [vmem:[%s5 + $0x158] sm:$0xff]
    %v842 = vld [vmem:[%s5 + $0x160] sm:$0xff]
    %v843 = vld [vmem:[%s5 + $0x168] sm:$0xff]
    %v844 = vld [vmem:[%s5 + $0x170] sm:$0xff]
    %v845 = vld [vmem:[%s5 + $0x178] sm:$0xff]
    %v846 = vld [vmem:[%s5 + $0x180] sm:$0xff]
    %v847 = vld [vmem:[%s5 + $0x188] sm:$0xff]
    %v848 = vld [vmem:[%s5 + $0x190] sm:$0xff]
    %v849 = vld [vmem:[%s5 + $0x198] sm:$0xff]
    %v850 = vld [vmem:[%s5 + $0x1a0] sm:$0xff]
    %v851 = vld [vmem:[%s5 + $0x1a8] sm:$0xff]
    %v852 = vld [vmem:[%s5 + $0x1b0] sm:$0xff]
    %v853 = vld [vmem:[%s5 + $0x1b8] sm:$0xff]
    %v854 = vld [vmem:[%s5 + $0x1c0] sm:$0xff]
    %v855 = vld [vmem:[%s5 + $0x1c8] sm:$0xff]
    %v856 = vld [vmem:[%s5 + $0x1d0] sm:$0xff]
    %v857 = vld [vmem:[%s5 + $0x1d8] sm:$0xff]
    %v858 = vld [vmem:[%s5 + $0x1e0] sm:$0xff]
    %v859 = vld [vmem:[%s5 + $0x1e8] sm:$0xff]
    %v860 = vld [vmem:[%s5 + $0x1f0] sm:$0xff]
    %v861 = vld [vmem:[%s5 + $0x1f8] sm:$0xff]
    %v862 = vld [vmem:[%s5 + $0x200] sm:$0xff]
    %v863 = vld [vmem:[%s5 + $0x208] sm:$0xff]
    %v864 = vld [vmem:[%s5 + $0x210] sm:$0xff]
    %v865 = vld [vmem:[%s5 + $0x218] sm:$0xff]
    %v866 = vld [vmem:[%s5 + $0x220] sm:$0xff]
    %v867 = vld [vmem:[%s5 + $0x228] sm:$0xff]
    %v868 = vld [vmem:[%s5 + $0x230] sm:$0xff]
    %v869 = vld [vmem:[%s5 + $0x238] sm:$0xff]
    %v870 = vld [vmem:[%s5 + $0x240] sm:$0xff]
    %v871 = vld [vmem:[%s5 + $0x248] sm:$0xff]
    %v872 = vld [vmem:[%s5 + $0x250] sm:$0xff]
    %v873 = vld [vmem:[%s5 + $0x258] sm:$0xff]
    %v874 = vld [vmem:[%s5 + $0x260] sm:$0xff]
    %v875 = vld [vmem:[%s5 + $0x268] sm:$0xff]
    %v876 = vld [vmem:[%s5 + $0x270] sm:$0xff]
    %v877 = vld [vmem:[%s5 + $0x278] sm:$0xff]
    %v878 = vld [vmem:[%s5 + $0x280] sm:$0xff]
    %v879 = vld [vmem:[%s5 + $0x288] sm:$0xff]
    %v880 = vld [vmem:[%s5 + $0x290] sm:$0xff]
    %v881 = vld [vmem:[%s5 + $0x298] sm:$0xff]
    %v882 = vld [vmem:[%s5 + $0x2a0] sm:$0xff]
    %v883 = vld [vmem:[%s5 + $0x2a8] sm:$0xff]
    %v884 = vld [vmem:[%s5 + $0x2b0] sm:$0xff]
    %v885 = vld [vmem:[%s5 + $0x2b8] sm:$0xff]
    %v886 = vld [vmem:[%s5 + $0x2c0] sm:$0xff]
    %v887 = vld [vmem:[%s5 + $0x2c8] sm:$0xff]
    %v888 = vld [vmem:[%s5 + $0x2d0] sm:$0xff]
    %v889 = vld [vmem:[%s5 + $0x2d8] sm:$0xff]
    %v890 = vld [vmem:[%s5 + $0x2e0] sm:$0xff]
    %v891 = vld [vmem:[%s5 + $0x2e8] sm:$0xff]
    %v892 = vld [vmem:[%s5 + $0x2f0] sm:$0xff]
    %v893 = vld [vmem:[%s5 + $0x2f8] sm:$0xff]
    %v894 = vld [vmem:[%s5 + $0x300] sm:$0xff]
    %v895 = vld [vmem:[%s5 + $0x308] sm:$0xff]
    %v896 = vld [vmem:[%s5 + $0x310] sm:$0xff]
    %v897 = vld [vmem:[%s5 + $0x318] sm:$0xff]
    %v898 = vld [vmem:[%s5 + $0x320] sm:$0xff]
    %v899 = vld [vmem:[%s5 + $0x328] sm:$0xff]
    %v900 = vld [vmem:[%s5 + $0x330] sm:$0xff]
    %v901 = vld [vmem:[%s5 + $0x338] sm:$0xff]
    %v902 = vld [vmem:[%s5 + $0x340] sm:$0xff]
    %v903 = vld [vmem:[%s5 + $0x348] sm:$0xff]
    %v904 = vld [vmem:[%s5 + $0x350] sm:$0xff]
    %v905 = vld [vmem:[%s5 + $0x358] sm:$0xff]
    %v906 = vld [vmem:[%s5 + $0x360] sm:$0xff]
    %v907 = vld [vmem:[%s5 + $0x368] sm:$0xff]
    %v908 = vld [vmem:[%s5 + $0x370] sm:$0xff]
    %v909 = vld [vmem:[%s5 + $0x378] sm:$0xff]
    %v910 = vld [vmem:[%s5 + $0x380] sm:$0xff]
    %v911 = vld [vmem:[%s5 + $0x388] sm:$0xff]
    %v912 = vld [vmem:[%s5 + $0x390] sm:$0xff]
    %v913 = vld [vmem:[%s5 + $0x398] sm:$0xff]
    %v914 = vld [vmem:[%s5 + $0x3a0] sm:$0xff]
    %v915 = vld [vmem:[%s5 + $0x3a8] sm:$0xff]
    %v916 = vld [vmem:[%s5 + $0x3b0] sm:$0xff]
    %v917 = vld [vmem:[%s5 + $0x3b8] sm:$0xff]
    %v918 = vld [vmem:[%s5 + $0x3c0] sm:$0xff]
    %v919 = vld [vmem:[%s5 + $0x3c8] sm:$0xff]
    %v920 = vld [vmem:[%s5 + $0x3d0] sm:$0xff]
    %v921 = vld [vmem:[%s5 + $0x3d8] sm:$0xff]
    %v922 = vld [vmem:[%s5 + $0x3e0] sm:$0xff]
    %v923 = vld [vmem:[%s5 + $0x3e8] sm:$0xff]
    %v924 = vld [vmem:[%s5 + $0x3f0] sm:$0xff]
    %v925 = vld [vmem:[%s5 + $0x3f8] sm:$0xff]
    %v926 = vld [vmem:[%s6] sm:$0xf]
    %v928 = vperm.slane %v926, 0
    %v929 = vperm.slane %v926, 1
    %v930 = vperm.slane %v926, 2
    %v931 = vperm.slane %v926, 3
    %v1064 = vunpack.c.l.b16 %v798
    %v1065 = vunpack.c.h.b16 %v798
    %v1066 = vunpack.c.l.b16 %v799
    %v1067 = vunpack.c.h.b16 %v799
    %v1068 = vunpack.c.l.b16 %v800
    %v1069 = vunpack.c.h.b16 %v800
    %v1070 = vunpack.c.l.b16 %v801
    %v1071 = vunpack.c.h.b16 %v801
    %v1072 = vunpack.c.l.b16 %v802
    %v1073 = vunpack.c.h.b16 %v802
    %v1074 = vunpack.c.l.b16 %v803
    %v1075 = vunpack.c.h.b16 %v803
    %v1076 = vunpack.c.l.b16 %v804
    %v1077 = vunpack.c.h.b16 %v804
    %v1078 = vunpack.c.l.b16 %v805
    %v1079 = vunpack.c.h.b16 %v805
    %v1080 = vunpack.c.l.b16 %v806
    %v1081 = vunpack.c.h.b16 %v806
    %v1082 = vunpack.c.l.b16 %v807
    %v1083 = vunpack.c.h.b16 %v807
    %v1084 = vunpack.c.l.b16 %v808
    %v1085 = vunpack.c.h.b16 %v808
    %v1086 = vunpack.c.l.b16 %v809
    %v1087 = vunpack.c.h.b16 %v809
    %v1088 = vunpack.c.l.b16 %v810
    %v1089 = vunpack.c.h.b16 %v810
    %v1090 = vunpack.c.l.b16 %v811
    %v1091 = vunpack.c.h.b16 %v811
    %v1092 = vunpack.c.l.b16 %v812
    %v1093 = vunpack.c.h.b16 %v812
    %v1094 = vunpack.c.l.b16 %v813
    %v1095 = vunpack.c.h.b16 %v813
    %v1096 = vunpack.c.l.b16 %v814
    %v1097 = vunpack.c.h.b16 %v814
    %v1098 = vunpack.c.l.b16 %v815
    %v1099 = vunpack.c.h.b16 %v815
    %v1100 = vunpack.c.l.b16 %v816
    %v1101 = vunpack.c.h.b16 %v816
    %v1102 = vunpack.c.l.b16 %v817
    %v1103 = vunpack.c.h.b16 %v817
    %v1104 = vunpack.c.l.b16 %v818
    %v1105 = vunpack.c.h.b16 %v818
    %v1106 = vunpack.c.l.b16 %v819
    %v1107 = vunpack.c.h.b16 %v819
    %v1108 = vunpack.c.l.b16 %v820
    %v1109 = vunpack.c.h.b16 %v820
    %v1110 = vunpack.c.l.b16 %v821
    %v1111 = vunpack.c.h.b16 %v821
    %v1112 = vunpack.c.l.b16 %v822
    %v1113 = vunpack.c.h.b16 %v822
    %v1114 = vunpack.c.l.b16 %v823
    %v1115 = vunpack.c.h.b16 %v823
    %v1116 = vunpack.c.l.b16 %v824
    %v1117 = vunpack.c.h.b16 %v824
    %v1118 = vunpack.c.l.b16 %v825
    %v1119 = vunpack.c.h.b16 %v825
    %v1120 = vunpack.c.l.b16 %v826
    %v1121 = vunpack.c.h.b16 %v826
    %v1122 = vunpack.c.l.b16 %v827
    %v1123 = vunpack.c.h.b16 %v827
    %v1124 = vunpack.c.l.b16 %v828
    %v1125 = vunpack.c.h.b16 %v828
    %v1126 = vunpack.c.l.b16 %v829
    %v1127 = vunpack.c.h.b16 %v829
    %v1128 = vunpack.c.l.b16 %v830
    %v1129 = vunpack.c.h.b16 %v830
    %v1130 = vunpack.c.l.b16 %v831
    %v1131 = vunpack.c.h.b16 %v831
    %v1132 = vunpack.c.l.b16 %v832
    %v1133 = vunpack.c.h.b16 %v832
    %v1134 = vunpack.c.l.b16 %v833
    %v1135 = vunpack.c.h.b16 %v833
    %v1136 = vunpack.c.l.b16 %v834
    %v1137 = vunpack.c.h.b16 %v834
    %v1138 = vunpack.c.l.b16 %v835
    %v1139 = vunpack.c.h.b16 %v835
    %v1140 = vunpack.c.l.b16 %v836
    %v1141 = vunpack.c.h.b16 %v836
    %v1142 = vunpack.c.l.b16 %v837
    %v1143 = vunpack.c.h.b16 %v837
    %v1144 = vunpack.c.l.b16 %v838
    %v1145 = vunpack.c.h.b16 %v838
    %v1146 = vunpack.c.l.b16 %v839
    %v1147 = vunpack.c.h.b16 %v839
    %v1148 = vunpack.c.l.b16 %v840
    %v1149 = vunpack.c.h.b16 %v840
    %v1150 = vunpack.c.l.b16 %v841
    %v1151 = vunpack.c.h.b16 %v841
    %v1152 = vunpack.c.l.b16 %v842
    %v1153 = vunpack.c.h.b16 %v842
    %v1154 = vunpack.c.l.b16 %v843
    %v1155 = vunpack.c.h.b16 %v843
    %v1156 = vunpack.c.l.b16 %v844
    %v1157 = vunpack.c.h.b16 %v844
    %v1158 = vunpack.c.l.b16 %v845
    %v1159 = vunpack.c.h.b16 %v845
    %v1160 = vunpack.c.l.b16 %v846
    %v1161 = vunpack.c.h.b16 %v846
    %v1162 = vunpack.c.l.b16 %v847
    %v1163 = vunpack.c.h.b16 %v847
    %v1164 = vunpack.c.l.b16 %v848
    %v1165 = vunpack.c.h.b16 %v848
    %v1166 = vunpack.c.l.b16 %v849
    %v1167 = vunpack.c.h.b16 %v849
    %v1168 = vunpack.c.l.b16 %v850
    %v1169 = vunpack.c.h.b16 %v850
    %v1170 = vunpack.c.l.b16 %v851
    %v1171 = vunpack.c.h.b16 %v851
    %v1172 = vunpack.c.l.b16 %v852
    %v1173 = vunpack.c.h.b16 %v852
    %v1174 = vunpack.c.l.b16 %v853
    %v1175 = vunpack.c.h.b16 %v853
    %v1176 = vunpack.c.l.b16 %v854
    %v1177 = vunpack.c.h.b16 %v854
    %v1178 = vunpack.c.l.b16 %v855
    %v1179 = vunpack.c.h.b16 %v855
    %v1180 = vunpack.c.l.b16 %v856
    %v1181 = vunpack.c.h.b16 %v856
    %v1182 = vunpack.c.l.b16 %v857
    %v1183 = vunpack.c.h.b16 %v857
    %v1184 = vunpack.c.l.b16 %v858
    %v1185 = vunpack.c.h.b16 %v858
    %v1186 = vunpack.c.l.b16 %v859
    %v1187 = vunpack.c.h.b16 %v859
    %v1188 = vunpack.c.l.b16 %v860
    %v1189 = vunpack.c.h.b16 %v860
    %v1190 = vunpack.c.l.b16 %v861
    %v1191 = vunpack.c.h.b16 %v861
    %v1192 = vunpack.c.l.b16 %v862
    %v1193 = vunpack.c.h.b16 %v862
    %v1194 = vunpack.c.l.b16 %v863
    %v1195 = vunpack.c.h.b16 %v863
    %v1196 = vunpack.c.l.b16 %v864
    %v1197 = vunpack.c.h.b16 %v864
    %v1198 = vunpack.c.l.b16 %v865
    %v1199 = vunpack.c.h.b16 %v865
    %v1200 = vunpack.c.l.b16 %v866
    %v1201 = vunpack.c.h.b16 %v866
    %v1202 = vunpack.c.l.b16 %v867
    %v1203 = vunpack.c.h.b16 %v867
    %v1204 = vunpack.c.l.b16 %v868
    %v1205 = vunpack.c.h.b16 %v868
    %v1206 = vunpack.c.l.b16 %v869
    %v1207 = vunpack.c.h.b16 %v869
    %v1208 = vunpack.c.l.b16 %v870
    %v1209 = vunpack.c.h.b16 %v870
    %v1210 = vunpack.c.l.b16 %v871
    %v1211 = vunpack.c.h.b16 %v871
    %v1212 = vunpack.c.l.b16 %v872
    %v1213 = vunpack.c.h.b16 %v872
    %v1214 = vunpack.c.l.b16 %v873
    %v1215 = vunpack.c.h.b16 %v873
    %v1216 = vunpack.c.l.b16 %v874
    %v1217 = vunpack.c.h.b16 %v874
    %v1218 = vunpack.c.l.b16 %v875
    %v1219 = vunpack.c.h.b16 %v875
    %v1220 = vunpack.c.l.b16 %v876
    %v1221 = vunpack.c.h.b16 %v876
    %v1222 = vunpack.c.l.b16 %v877
    %v1223 = vunpack.c.h.b16 %v877
    %v1224 = vunpack.c.l.b16 %v878
    %v1225 = vunpack.c.h.b16 %v878
    %v1226 = vunpack.c.l.b16 %v879
    %v1227 = vunpack.c.h.b16 %v879
    %v1228 = vunpack.c.l.b16 %v880
    %v1229 = vunpack.c.h.b16 %v880
    %v1230 = vunpack.c.l.b16 %v881
    %v1231 = vunpack.c.h.b16 %v881
    %v1232 = vunpack.c.l.b16 %v882
    %v1233 = vunpack.c.h.b16 %v882
    %v1234 = vunpack.c.l.b16 %v883
    %v1235 = vunpack.c.h.b16 %v883
    %v1236 = vunpack.c.l.b16 %v884
    %v1237 = vunpack.c.h.b16 %v884
    %v1238 = vunpack.c.l.b16 %v885
    %v1239 = vunpack.c.h.b16 %v885
    %v1240 = vunpack.c.l.b16 %v886
    %v1241 = vunpack.c.h.b16 %v886
    %v1242 = vunpack.c.l.b16 %v887
    %v1243 = vunpack.c.h.b16 %v887
    %v1244 = vunpack.c.l.b16 %v888
    %v1245 = vunpack.c.h.b16 %v888
    %v1246 = vunpack.c.l.b16 %v889
    %v1247 = vunpack.c.h.b16 %v889
    %v1248 = vunpack.c.l.b16 %v890
    %v1249 = vunpack.c.h.b16 %v890
    %v1250 = vunpack.c.l.b16 %v891
    %v1251 = vunpack.c.h.b16 %v891
    %v1252 = vunpack.c.l.b16 %v892
    %v1253 = vunpack.c.h.b16 %v892
    %v1254 = vunpack.c.l.b16 %v893
    %v1255 = vunpack.c.h.b16 %v893
    %v1256 = vunpack.c.l.b16 %v894
    %v1257 = vunpack.c.h.b16 %v894
    %v1258 = vunpack.c.l.b16 %v895
    %v1259 = vunpack.c.h.b16 %v895
    %v1260 = vunpack.c.l.b16 %v896
    %v1261 = vunpack.c.h.b16 %v896
    %v1262 = vunpack.c.l.b16 %v897
    %v1263 = vunpack.c.h.b16 %v897
    %v1264 = vunpack.c.l.b16 %v898
    %v1265 = vunpack.c.h.b16 %v898
    %v1266 = vunpack.c.l.b16 %v899
    %v1267 = vunpack.c.h.b16 %v899
    %v1268 = vunpack.c.l.b16 %v900
    %v1269 = vunpack.c.h.b16 %v900
    %v1270 = vunpack.c.l.b16 %v901
    %v1271 = vunpack.c.h.b16 %v901
    %v1272 = vunpack.c.l.b16 %v902
    %v1273 = vunpack.c.h.b16 %v902
    %v1274 = vunpack.c.l.b16 %v903
    %v1275 = vunpack.c.h.b16 %v903
    %v1276 = vunpack.c.l.b16 %v904
    %v1277 = vunpack.c.h.b16 %v904
    %v1278 = vunpack.c.l.b16 %v905
    %v1279 = vunpack.c.h.b16 %v905
    %v1280 = vunpack.c.l.b16 %v906
    %v1281 = vunpack.c.h.b16 %v906
    %v1282 = vunpack.c.l.b16 %v907
    %v1283 = vunpack.c.h.b16 %v907
    %v1284 = vunpack.c.l.b16 %v908
    %v1285 = vunpack.c.h.b16 %v908
    %v1286 = vunpack.c.l.b16 %v909
    %v1287 = vunpack.c.h.b16 %v909
    %v1288 = vunpack.c.l.b16 %v910
    %v1289 = vunpack.c.h.b16 %v910
    %v1290 = vunpack.c.l.b16 %v911
    %v1291 = vunpack.c.h.b16 %v911
    %v1292 = vunpack.c.l.b16 %v912
    %v1293 = vunpack.c.h.b16 %v912
    %v1294 = vunpack.c.l.b16 %v913
    %v1295 = vunpack.c.h.b16 %v913
    %v1296 = vunpack.c.l.b16 %v914
    %v1297 = vunpack.c.h.b16 %v914
    %v1298 = vunpack.c.l.b16 %v915
    %v1299 = vunpack.c.h.b16 %v915
    %v1300 = vunpack.c.l.b16 %v916
    %v1301 = vunpack.c.h.b16 %v916
    %v1302 = vunpack.c.l.b16 %v917
    %v1303 = vunpack.c.h.b16 %v917
    %v1304 = vunpack.c.l.b16 %v918
    %v1305 = vunpack.c.h.b16 %v918
    %v1306 = vunpack.c.l.b16 %v919
    %v1307 = vunpack.c.h.b16 %v919
    %v1308 = vunpack.c.l.b16 %v920
    %v1309 = vunpack.c.h.b16 %v920
    %v1310 = vunpack.c.l.b16 %v921
    %v1311 = vunpack.c.h.b16 %v921
    %v1312 = vunpack.c.l.b16 %v922
    %v1313 = vunpack.c.h.b16 %v922
    %v1314 = vunpack.c.l.b16 %v923
    %v1315 = vunpack.c.h.b16 %v923
    %v1316 = vunpack.c.l.b16 %v924
    %v1317 = vunpack.c.h.b16 %v924
    %v1318 = vunpack.c.l.b16 %v925
    %v1319 = vunpack.c.h.b16 %v925
    %v1320 = vpack.c.b16 %v1068, %v1064
    %v1321 = vpack.c.b16 %v1069, %v1065
    %v1322 = vpack.c.b16 %v1070, %v1066
    %v1323 = vpack.c.b16 %v1071, %v1067
    %v1324 = vpack.c.b16 %v1076, %v1072
    %v1325 = vpack.c.b16 %v1077, %v1073
    %v1326 = vpack.c.b16 %v1078, %v1074
    %v1327 = vpack.c.b16 %v1079, %v1075
    %v1328 = vpack.c.b16 %v1084, %v1080
    %v1329 = vpack.c.b16 %v1085, %v1081
    %v1330 = vpack.c.b16 %v1086, %v1082
    %v1331 = vpack.c.b16 %v1087, %v1083
    %v1332 = vpack.c.b16 %v1092, %v1088
    %v1333 = vpack.c.b16 %v1093, %v1089
    %v1334 = vpack.c.b16 %v1094, %v1090
    %v1335 = vpack.c.b16 %v1095, %v1091
    %v1336 = vpack.c.b16 %v1100, %v1096
    %v1337 = vpack.c.b16 %v1101, %v1097
    %v1338 = vpack.c.b16 %v1102, %v1098
    %v1339 = vpack.c.b16 %v1103, %v1099
    %v1340 = vpack.c.b16 %v1108, %v1104
    %v1341 = vpack.c.b16 %v1109, %v1105
    %v1342 = vpack.c.b16 %v1110, %v1106
    %v1343 = vpack.c.b16 %v1111, %v1107
    %v1344 = vpack.c.b16 %v1116, %v1112
    %v1345 = vpack.c.b16 %v1117, %v1113
    %v1346 = vpack.c.b16 %v1118, %v1114
    %v1347 = vpack.c.b16 %v1119, %v1115
    %v1348 = vpack.c.b16 %v1124, %v1120
    %v1349 = vpack.c.b16 %v1125, %v1121
    %v1350 = vpack.c.b16 %v1126, %v1122
    %v1351 = vpack.c.b16 %v1127, %v1123
    %v1352 = vpack.c.b16 %v1132, %v1128
    %v1353 = vpack.c.b16 %v1133, %v1129
    %v1354 = vpack.c.b16 %v1134, %v1130
    %v1355 = vpack.c.b16 %v1135, %v1131
    %v1356 = vpack.c.b16 %v1140, %v1136
    %v1357 = vpack.c.b16 %v1141, %v1137
    %v1358 = vpack.c.b16 %v1142, %v1138
    %v1359 = vpack.c.b16 %v1143, %v1139
    %v1360 = vpack.c.b16 %v1148, %v1144
    %v1361 = vpack.c.b16 %v1149, %v1145
    %v1362 = vpack.c.b16 %v1150, %v1146
    %v1363 = vpack.c.b16 %v1151, %v1147
    %v1364 = vpack.c.b16 %v1156, %v1152
    %v1365 = vpack.c.b16 %v1157, %v1153
    %v1366 = vpack.c.b16 %v1158, %v1154
    %v1367 = vpack.c.b16 %v1159, %v1155
    %v1368 = vpack.c.b16 %v1164, %v1160
    %v1369 = vpack.c.b16 %v1165, %v1161
    %v1370 = vpack.c.b16 %v1166, %v1162
    %v1371 = vpack.c.b16 %v1167, %v1163
    %v1372 = vpack.c.b16 %v1172, %v1168
    %v1373 = vpack.c.b16 %v1173, %v1169
    %v1374 = vpack.c.b16 %v1174, %v1170
    %v1375 = vpack.c.b16 %v1175, %v1171
    %v1376 = vpack.c.b16 %v1180, %v1176
    %v1377 = vpack.c.b16 %v1181, %v1177
    %v1378 = vpack.c.b16 %v1182, %v1178
    %v1379 = vpack.c.b16 %v1183, %v1179
    %v1380 = vpack.c.b16 %v1188, %v1184
    %v1381 = vpack.c.b16 %v1189, %v1185
    %v1382 = vpack.c.b16 %v1190, %v1186
    %v1383 = vpack.c.b16 %v1191, %v1187
    %v1384 = vpack.c.b16 %v1196, %v1192
    %v1385 = vpack.c.b16 %v1197, %v1193
    %v1386 = vpack.c.b16 %v1198, %v1194
    %v1387 = vpack.c.b16 %v1199, %v1195
    %v1388 = vpack.c.b16 %v1204, %v1200
    %v1389 = vpack.c.b16 %v1205, %v1201
    %v1390 = vpack.c.b16 %v1206, %v1202
    %v1391 = vpack.c.b16 %v1207, %v1203
    %v1392 = vpack.c.b16 %v1212, %v1208
    %v1393 = vpack.c.b16 %v1213, %v1209
    %v1394 = vpack.c.b16 %v1214, %v1210
    %v1395 = vpack.c.b16 %v1215, %v1211
    %v1396 = vpack.c.b16 %v1220, %v1216
    %v1397 = vpack.c.b16 %v1221, %v1217
    %v1398 = vpack.c.b16 %v1222, %v1218
    %v1399 = vpack.c.b16 %v1223, %v1219
    %v1400 = vpack.c.b16 %v1228, %v1224
    %v1401 = vpack.c.b16 %v1229, %v1225
    %v1402 = vpack.c.b16 %v1230, %v1226
    %v1403 = vpack.c.b16 %v1231, %v1227
    %v1404 = vpack.c.b16 %v1236, %v1232
    %v1405 = vpack.c.b16 %v1237, %v1233
    %v1406 = vpack.c.b16 %v1238, %v1234
    %v1407 = vpack.c.b16 %v1239, %v1235
    %v1408 = vpack.c.b16 %v1244, %v1240
    %v1409 = vpack.c.b16 %v1245, %v1241
    %v1410 = vpack.c.b16 %v1246, %v1242
    %v1411 = vpack.c.b16 %v1247, %v1243
    %v1412 = vpack.c.b16 %v1252, %v1248
    %v1413 = vpack.c.b16 %v1253, %v1249
    %v1414 = vpack.c.b16 %v1254, %v1250
    %v1415 = vpack.c.b16 %v1255, %v1251
    %v1416 = vpack.c.b16 %v1260, %v1256
    %v1417 = vpack.c.b16 %v1261, %v1257
    %v1418 = vpack.c.b16 %v1262, %v1258
    %v1419 = vpack.c.b16 %v1263, %v1259
    %v1420 = vpack.c.b16 %v1268, %v1264
    %v1421 = vpack.c.b16 %v1269, %v1265
    %v1422 = vpack.c.b16 %v1270, %v1266
    %v1423 = vpack.c.b16 %v1271, %v1267
    %v1424 = vpack.c.b16 %v1276, %v1272
    %v1425 = vpack.c.b16 %v1277, %v1273
    %v1426 = vpack.c.b16 %v1278, %v1274
    %v1427 = vpack.c.b16 %v1279, %v1275
    %v1428 = vpack.c.b16 %v1284, %v1280
    %v1429 = vpack.c.b16 %v1285, %v1281
    %v1430 = vpack.c.b16 %v1286, %v1282
    %v1431 = vpack.c.b16 %v1287, %v1283
    %v1432 = vpack.c.b16 %v1292, %v1288
    %v1433 = vpack.c.b16 %v1293, %v1289
    %v1434 = vpack.c.b16 %v1294, %v1290
    %v1435 = vpack.c.b16 %v1295, %v1291
    %v1436 = vpack.c.b16 %v1300, %v1296
    %v1437 = vpack.c.b16 %v1301, %v1297
    %v1438 = vpack.c.b16 %v1302, %v1298
    %v1439 = vpack.c.b16 %v1303, %v1299
    %v1440 = vpack.c.b16 %v1308, %v1304
    %v1441 = vpack.c.b16 %v1309, %v1305
    %v1442 = vpack.c.b16 %v1310, %v1306
    %v1443 = vpack.c.b16 %v1311, %v1307
    %v1444 = vpack.c.b16 %v1316, %v1312
    %v1445 = vpack.c.b16 %v1317, %v1313
    %v1446 = vpack.c.b16 %v1318, %v1314
    %v1447 = vpack.c.b16 %v1319, %v1315
    %1576 = vmatpush.bf16.msra.mxu0 %v1348
    %1577 = vmatpush.bf16.msra.mxu0 %v1344
    %1578 = vmatpush.bf16.msra.mxu0 %v1340
    %1579 = vmatpush.bf16.msra.mxu0 %v1336
    %1580 = vmatpush.bf16.msra.mxu0 %v1332
    %1581 = vmatpush.bf16.msra.mxu0 %v1328
    %1582 = vmatpush.bf16.msra.mxu0 %v1324
    %1583 = vmatpush.bf16.msra.mxu0 %v1320
    %1584 = vmatmul.bf16.gmra.mxu0 %v794
    %v1585 = vpop.f32.mrf.mxu0
    %v1586 = vadd.f32 %v928, %v1585
    %v1587 = vpop.f32.mrf.mxu0
    %v1588 = vadd.f32 %v928, %v1587
    %1589 = vdwg.mxu0
    %1590 = vmatpush.bf16.msra.mxu0 %v1380
    %1591 = vmatpush.bf16.msra.mxu0 %v1376
    %1592 = vmatpush.bf16.msra.mxu0 %v1372
    %1593 = vmatpush.bf16.msra.mxu0 %v1368
    %1594 = vmatpush.bf16.msra.mxu0 %v1364
    %1595 = vmatpush.bf16.msra.mxu0 %v1360
    %1596 = vmatpush.bf16.msra.mxu0 %v1356
    %1597 = vmatpush.bf16.msra.mxu0 %v1352
    %1598 = vmatmul.bf16.gmra.mxu0 %v795
    %v1599 = vpop.f32.mrf.mxu0
    %v1600 = vadd.f32 %v1586, %v1599
    %v1601 = vpop.f32.mrf.mxu0
    %v1602 = vadd.f32 %v1588, %v1601
    %1603 = vdwg.mxu0
    %1604 = vmatpush.bf16.msra.mxu0 %v1412
    %1605 = vmatpush.bf16.msra.mxu0 %v1408
    %1606 = vmatpush.bf16.msra.mxu0 %v1404
    %1607 = vmatpush.bf16.msra.mxu0 %v1400
    %1608 = vmatpush.bf16.msra.mxu0 %v1396
    %1609 = vmatpush.bf16.msra.mxu0 %v1392
    %1610 = vmatpush.bf16.msra.mxu0 %v1388
    %1611 = vmatpush.bf16.msra.mxu0 %v1384
    %1612 = vmatmul.bf16.gmra.mxu0 %v796
    %v1613 = vpop.f32.mrf.mxu0
    %v1614 = vadd.f32 %v1600, %v1613
    %v1615 = vpop.f32.mrf.mxu0
    %v1616 = vadd.f32 %v1602, %v1615
    %1617 = vdwg.mxu0
    %1618 = vmatpush.bf16.msra.mxu0 %v1444
    %1619 = vmatpush.bf16.msra.mxu0 %v1440
    %1620 = vmatpush.bf16.msra.mxu0 %v1436
    %1621 = vmatpush.bf16.msra.mxu0 %v1432
    %1622 = vmatpush.bf16.msra.mxu0 %v1428
    %1623 = vmatpush.bf16.msra.mxu0 %v1424
    %1624 = vmatpush.bf16.msra.mxu0 %v1420
    %1625 = vmatpush.bf16.msra.mxu0 %v1416
    %1626 = vmatmul.bf16.gmra.mxu0 %v797
    %v1627 = vpop.f32.mrf.mxu0
    %v1628 = vadd.f32 %v1614, %v1627
    %v1629 = vpop.f32.mrf.mxu0
    %v1630 = vadd.f32 %v1616, %v1629
    %1631 = vdwg.mxu0
    %1632 = vmatpush.bf16.msra.mxu0 %v1349
    %1633 = vmatpush.bf16.msra.mxu0 %v1345
    %1634 = vmatpush.bf16.msra.mxu0 %v1341
    %1635 = vmatpush.bf16.msra.mxu0 %v1337
    %1636 = vmatpush.bf16.msra.mxu0 %v1333
    %1637 = vmatpush.bf16.msra.mxu0 %v1329
    %1638 = vmatpush.bf16.msra.mxu0 %v1325
    %1639 = vmatpush.bf16.msra.mxu0 %v1321
    %1640 = vmatmul.bf16.gmra.mxu0 %v794
    %v1641 = vpop.f32.mrf.mxu0
    %v1642 = vadd.f32 %v929, %v1641
    %v1643 = vpop.f32.mrf.mxu0
    %v1644 = vadd.f32 %v929, %v1643
    %1645 = vdwg.mxu0
    %1646 = vmatpush.bf16.msra.mxu0 %v1381
    %1647 = vmatpush.bf16.msra.mxu0 %v1377
    %1648 = vmatpush.bf16.msra.mxu0 %v1373
    %1649 = vmatpush.bf16.msra.mxu0 %v1369
    %1650 = vmatpush.bf16.msra.mxu0 %v1365
    %1651 = vmatpush.bf16.msra.mxu0 %v1361
    %1652 = vmatpush.bf16.msra.mxu0 %v1357
    %1653 = vmatpush.bf16.msra.mxu0 %v1353
    %1654 = vmatmul.bf16.gmra.mxu0 %v795
    %v1655 = vpop.f32.mrf.mxu0
    %v1656 = vadd.f32 %v1642, %v1655
    %v1657 = vpop.f32.mrf.mxu0
    %v1658 = vadd.f32 %v1644, %v1657
    %1659 = vdwg.mxu0
    %1660 = vmatpush.bf16.msra.mxu0 %v1413
    %1661 = vmatpush.bf16.msra.mxu0 %v1409
    %1662 = vmatpush.bf16.msra.mxu0 %v1405
    %1663 = vmatpush.bf16.msra.mxu0 %v1401
    %1664 = vmatpush.bf16.msra.mxu0 %v1397
    %1665 = vmatpush.bf16.msra.mxu0 %v1393
    %1666 = vmatpush.bf16.msra.mxu0 %v1389
    %1667 = vmatpush.bf16.msra.mxu0 %v1385
    %1668 = vmatmul.bf16.gmra.mxu0 %v796
    %v1669 = vpop.f32.mrf.mxu0
    %v1670 = vadd.f32 %v1656, %v1669
    %v1671 = vpop.f32.mrf.mxu0
    %v1672 = vadd.f32 %v1658, %v1671
    %1673 = vdwg.mxu0
    %1674 = vmatpush.bf16.msra.mxu0 %v1445
    %1675 = vmatpush.bf16.msra.mxu0 %v1441
    %1676 = vmatpush.bf16.msra.mxu0 %v1437
    %1677 = vmatpush.bf16.msra.mxu0 %v1433
    %1678 = vmatpush.bf16.msra.mxu0 %v1429
    %1679 = vmatpush.bf16.msra.mxu0 %v1425
    %1680 = vmatpush.bf16.msra.mxu0 %v1421
    %1681 = vmatpush.bf16.msra.mxu0 %v1417
    %1682 = vmatmul.bf16.gmra.mxu0 %v797
    %v1683 = vpop.f32.mrf.mxu0
    %v1684 = vadd.f32 %v1670, %v1683
    %v1685 = vpop.f32.mrf.mxu0
    %v1686 = vadd.f32 %v1672, %v1685
    %1687 = vdwg.mxu0
    %1688 = vmatpush.bf16.msra.mxu0 %v1350
    %1689 = vmatpush.bf16.msra.mxu0 %v1346
    %1690 = vmatpush.bf16.msra.mxu0 %v1342
    %1691 = vmatpush.bf16.msra.mxu0 %v1338
    %1692 = vmatpush.bf16.msra.mxu0 %v1334
    %1693 = vmatpush.bf16.msra.mxu0 %v1330
    %1694 = vmatpush.bf16.msra.mxu0 %v1326
    %1695 = vmatpush.bf16.msra.mxu0 %v1322
    %1696 = vmatmul.bf16.gmra.mxu0 %v794
    %v1697 = vpop.f32.mrf.mxu0
    %v1698 = vadd.f32 %v930, %v1697
    %v1699 = vpop.f32.mrf.mxu0
    %v1700 = vadd.f32 %v930, %v1699
    %1701 = vdwg.mxu0
    %1702 = vmatpush.bf16.msra.mxu0 %v1382
    %1703 = vmatpush.bf16.msra.mxu0 %v1378
    %1704 = vmatpush.bf16.msra.mxu0 %v1374
    %1705 = vmatpush.bf16.msra.mxu0 %v1370
    %1706 = vmatpush.bf16.msra.mxu0 %v1366
    %1707 = vmatpush.bf16.msra.mxu0 %v1362
    %1708 = vmatpush.bf16.msra.mxu0 %v1358
    %1709 = vmatpush.bf16.msra.mxu0 %v1354
    %1710 = vmatmul.bf16.gmra.mxu0 %v795
    %v1711 = vpop.f32.mrf.mxu0
    %v1712 = vadd.f32 %v1698, %v1711
    %v1713 = vpop.f32.mrf.mxu0
    %v1714 = vadd.f32 %v1700, %v1713
    %1715 = vdwg.mxu0
    %1716 = vmatpush.bf16.msra.mxu0 %v1414
    %1717 = vmatpush.bf16.msra.mxu0 %v1410
    %1718 = vmatpush.bf16.msra.mxu0 %v1406
    %1719 = vmatpush.bf16.msra.mxu0 %v1402
    %1720 = vmatpush.bf16.msra.mxu0 %v1398
    %1721 = vmatpush.bf16.msra.mxu0 %v1394
    %1722 = vmatpush.bf16.msra.mxu0 %v1390
    %1723 = vmatpush.bf16.msra.mxu0 %v1386
    %1724 = vmatmul.bf16.gmra.mxu0 %v796
    %v1725 = vpop.f32.mrf.mxu0
    %v1726 = vadd.f32 %v1712, %v1725
    %v1727 = vpop.f32.mrf.mxu0
    %v1728 = vadd.f32 %v1714, %v1727
    %1729 = vdwg.mxu0
    %1730 = vmatpush.bf16.msra.mxu0 %v1446
    %1731 = vmatpush.bf16.msra.mxu0 %v1442
    %1732 = vmatpush.bf16.msra.mxu0 %v1438
    %1733 = vmatpush.bf16.msra.mxu0 %v1434
    %1734 = vmatpush.bf16.msra.mxu0 %v1430
    %1735 = vmatpush.bf16.msra.mxu0 %v1426
    %1736 = vmatpush.bf16.msra.mxu0 %v1422
    %1737 = vmatpush.bf16.msra.mxu0 %v1418
    %1738 = vmatmul.bf16.gmra.mxu0 %v797
    %v1739 = vpop.f32.mrf.mxu0
    %v1740 = vadd.f32 %v1726, %v1739
    %v1741 = vpop.f32.mrf.mxu0
    %v1742 = vadd.f32 %v1728, %v1741
    %1743 = vdwg.mxu0
    %1744 = vmatpush.bf16.msra.mxu0 %v1351
    %1745 = vmatpush.bf16.msra.mxu0 %v1347
    %1746 = vmatpush.bf16.msra.mxu0 %v1343
    %1747 = vmatpush.bf16.msra.mxu0 %v1339
    %1748 = vmatpush.bf16.msra.mxu0 %v1335
    %1749 = vmatpush.bf16.msra.mxu0 %v1331
    %1750 = vmatpush.bf16.msra.mxu0 %v1327
    %1751 = vmatpush.bf16.msra.mxu0 %v1323
    %1752 = vmatmul.bf16.gmra.mxu0 %v794
    %v1753 = vpop.f32.mrf.mxu0
    %v1754 = vadd.f32 %v931, %v1753
    %v1755 = vpop.f32.mrf.mxu0
    %v1756 = vadd.f32 %v931, %v1755
    %1757 = vdwg.mxu0
    %1758 = vmatpush.bf16.msra.mxu0 %v1383
    %1759 = vmatpush.bf16.msra.mxu0 %v1379
    %1760 = vmatpush.bf16.msra.mxu0 %v1375
    %1761 = vmatpush.bf16.msra.mxu0 %v1371
    %1762 = vmatpush.bf16.msra.mxu0 %v1367
    %1763 = vmatpush.bf16.msra.mxu0 %v1363
    %1764 = vmatpush.bf16.msra.mxu0 %v1359
    %1765 = vmatpush.bf16.msra.mxu0 %v1355
    %1766 = vmatmul.bf16.gmra.mxu0 %v795
    %v1767 = vpop.f32.mrf.mxu0
    %v1768 = vadd.f32 %v1754, %v1767
    %v1769 = vpop.f32.mrf.mxu0
    %v1770 = vadd.f32 %v1756, %v1769
    %1771 = vdwg.mxu0
    %1772 = vmatpush.bf16.msra.mxu0 %v1415
    %1773 = vmatpush.bf16.msra.mxu0 %v1411
    %1774 = vmatpush.bf16.msra.mxu0 %v1407
    %1775 = vmatpush.bf16.msra.mxu0 %v1403
    %1776 = vmatpush.bf16.msra.mxu0 %v1399
    %1777 = vmatpush.bf16.msra.mxu0 %v1395
    %1778 = vmatpush.bf16.msra.mxu0 %v1391
    %1779 = vmatpush.bf16.msra.mxu0 %v1387
    %1780 = vmatmul.bf16.gmra.mxu0 %v796
    %v1781 = vpop.f32.mrf.mxu0
    %v1782 = vadd.f32 %v1768, %v1781
    %v1783 = vpop.f32.mrf.mxu0
    %v1784 = vadd.f32 %v1770, %v1783
    %1785 = vdwg.mxu0
    %1786 = vmatpush.bf16.msra.mxu0 %v1447
    %1787 = vmatpush.bf16.msra.mxu0 %v1443
    %1788 = vmatpush.bf16.msra.mxu0 %v1439
    %1789 = vmatpush.bf16.msra.mxu0 %v1435
    %1790 = vmatpush.bf16.msra.mxu0 %v1431
    %1791 = vmatpush.bf16.msra.mxu0 %v1427
    %1792 = vmatpush.bf16.msra.mxu0 %v1423
    %1793 = vmatpush.bf16.msra.mxu0 %v1419
    %1794 = vmatmul.bf16.gmra.mxu0 %v797
    %v1795 = vpop.f32.mrf.mxu0
    %v1796 = vadd.f32 %v1782, %v1795
    %v1797 = vpop.f32.mrf.mxu0
    %v1798 = vadd.f32 %v1784, %v1797
    %1799 = vdwg.mxu0
    %v1800 = vmul.f32 %v1628, %v1628
    %v1801 = vmul.f32 %v1684, %v1684
    %v1802 = vmul.f32 %v1740, %v1740
    %v1803 = vmul.f32 %v1796, %v1796
    %v1804 = vmul.f32 %v1630, %v1630
    %v1805 = vmul.f32 %v1686, %v1686
    %v1806 = vmul.f32 %v1742, %v1742
    %v1807 = vmul.f32 %v1798, %v1798
    %v1808 = vadd.f32 %v1800, %v1801
    %v1809 = vadd.f32 %v1808, %v1802
    %v1810 = vadd.f32 %v1809, %v1803
    %1811 = vadd.xlane.f32.xlu0 %v1810
    %v1812 = vpop.xlane.xlu0 %1811
    %v1813 = vadd.f32 %v1804, %v1805
    %v1814 = vadd.f32 %v1813, %v1806
    %v1815 = vadd.f32 %v1814, %v1807
    %1816 = vadd.xlane.f32.xlu0 %v1815
    %v1817 = vpop.xlane.xlu0 %1816
    %v1818 = vmax.f32 %v1812, 1e-16
    %v1819 = vmax.f32 %v1817, 1e-16
    %v1820 = vrsqrt.pop %v1818
    %v1821 = vmul.f32 %v1820, %v1818
    %v1822 = vmul.f32 %v1821, %v1820
    %v1823 = vmul.f32 0.5, %v1822
    %v1824 = vsub.f32 1.5, %v1823
    %v1825 = vmul.f32 %v1820, %v1824
    %vm1826 = vweird.f32 %v1818
    %vm1827 = vweird.f32 %v1820
    %vm1828 = vmor %vm1826, %vm1827
    %v1829 = vsel %vm1828, %v1820, %v1825
    %v1830 = vrsqrt.pop %v1819
    %v1831 = vmul.f32 %v1830, %v1819
    %v1832 = vmul.f32 %v1831, %v1830
    %v1833 = vmul.f32 0.5, %v1832
    %v1834 = vsub.f32 1.5, %v1833
    %v1835 = vmul.f32 %v1830, %v1834
    %vm1836 = vweird.f32 %v1819
    %vm1837 = vweird.f32 %v1830
    %vm1838 = vmor %vm1836, %vm1837
    %v1839 = vsel %vm1838, %v1830, %v1835
    %v1840 = vmul.f32 %v1628, %v1829
    %v1841 = vmul.f32 %v1684, %v1829
    %v1842 = vmul.f32 %v1740, %v1829
    %v1843 = vmul.f32 %v1796, %v1829
    %v1844 = vmul.f32 %v1630, %v1839
    %v1845 = vmul.f32 %v1686, %v1839
    %v1846 = vmul.f32 %v1742, %v1839
    %v1847 = vmul.f32 %v1798, %v1839
    %v1848 = vld [vmem:[%s1] sm:$0xff]
    %v1849 = vld [vmem:[%s1 + $0x8] sm:$0xff]
    %v1850 = vpack.c.bf16 %v1840, %v1840
    %v1851 = vpack.c.bf16 %v1841, %v1841
    %v1852 = vpack.c.bf16 %v1842, %v1842
    %v1853 = vpack.c.bf16 %v1843, %v1843
    %v1854 = vpack.c.bf16 %v664, %v664
    %v1855 = vpack.c.bf16 %v706, %v706
    %v1856 = vpack.c.bf16 %v748, %v748
    %v1857 = vpack.c.bf16 %v790, %v790
    %v1860 = vunpack.c.l.b16 %v1848
    %v1861 = vunpack.c.h.b16 %v1848
    %v1862 = vunpack.c.l.b16 %v1849
    %v1863 = vunpack.c.h.b16 %v1849
    %v1864 = vpack.c.b16 %v1860, %v1860
    %v1865 = vpack.c.b16 %v1861, %v1861
    %v1866 = vpack.c.b16 %v1862, %v1862
    %v1867 = vpack.c.b16 %v1863, %v1863
    %1872 = vmatpush.bf16.xpose.msra.mxu0 0
    %1873 = vmatpush.bf16.xpose.msra.mxu0 0
    %1874 = vmatpush.bf16.xpose.msra.mxu0 0
    %1875 = vmatpush.bf16.xpose.msra.mxu0 0
    %1876 = vmatpush.bf16.xpose.msra.mxu0 0
    %1877 = vmatpush.bf16.xpose.msra.mxu0 0
    %1878 = vmatpush.bf16.xpose.msra.mxu0 0
    %1879 = vmatpush.bf16.xpose.msra.mxu0 %v1850
    %1880 = vmatmul.bf16.gmra.mxu0 %v1864
    %v1881 = vpop.f32.mrf.mxu0
    %v1882 = vadd.f32 0.0, %v1881
    %v1883 = vpop.f32.mrf.mxu0
    %1884 = vdwg.mxu0
    %1885 = vmatpush.bf16.xpose.msra.mxu0 0
    %1886 = vmatpush.bf16.xpose.msra.mxu0 0
    %1887 = vmatpush.bf16.xpose.msra.mxu0 0
    %1888 = vmatpush.bf16.xpose.msra.mxu0 0
    %1889 = vmatpush.bf16.xpose.msra.mxu0 0
    %1890 = vmatpush.bf16.xpose.msra.mxu0 0
    %1891 = vmatpush.bf16.xpose.msra.mxu0 0
    %1892 = vmatpush.bf16.xpose.msra.mxu0 %v1851
    %1893 = vmatmul.bf16.gmra.mxu0 %v1865
    %v1894 = vpop.f32.mrf.mxu0
    %v1895 = vadd.f32 %v1882, %v1894
    %v1896 = vpop.f32.mrf.mxu0
    %1897 = vdwg.mxu0
    %1898 = vmatpush.bf16.xpose.msra.mxu0 0
    %1899 = vmatpush.bf16.xpose.msra.mxu0 0
    %1900 = vmatpush.bf16.xpose.msra.mxu0 0
    %1901 = vmatpush.bf16.xpose.msra.mxu0 0
    %1902 = vmatpush.bf16.xpose.msra.mxu0 0
    %1903 = vmatpush.bf16.xpose.msra.mxu0 0
    %1904 = vmatpush.bf16.xpose.msra.mxu0 0
    %1905 = vmatpush.bf16.xpose.msra.mxu0 %v1852
    %1906 = vmatmul.bf16.gmra.mxu0 %v1866
    %v1907 = vpop.f32.mrf.mxu0
    %v1908 = vadd.f32 %v1895, %v1907
    %v1909 = vpop.f32.mrf.mxu0
    %1910 = vdwg.mxu0
    %1911 = vmatpush.bf16.xpose.msra.mxu0 0
    %1912 = vmatpush.bf16.xpose.msra.mxu0 0
    %1913 = vmatpush.bf16.xpose.msra.mxu0 0
    %1914 = vmatpush.bf16.xpose.msra.mxu0 0
    %1915 = vmatpush.bf16.xpose.msra.mxu0 0
    %1916 = vmatpush.bf16.xpose.msra.mxu0 0
    %1917 = vmatpush.bf16.xpose.msra.mxu0 0
    %1918 = vmatpush.bf16.xpose.msra.mxu0 %v1853
    %1919 = vmatmul.bf16.gmra.mxu0 %v1867
    %v1920 = vpop.f32.mrf.mxu0
    %v1921 = vadd.f32 %v1908, %v1920
    %v1922 = vpop.f32.mrf.mxu0
    %1923 = vdwg.mxu0
    %v1924 = vmul.f32 %v1921, 1.442695
    %v1925 = vpow.pop %v1924
    %vm1926 = vcmask 64512
    %v1927 = vsel %vm1926, %v1925, 0.0
    %1928 = vadd.xlane.f32.xlu0 %v1927
    %v1929 = vpop.xlane.xlu0 %1928
    %v1930 = vrcp.pop %v1929
    %v1931 = vmul.f32 %v1929, %v1930
    %v1932 = vsub.f32 1.0, %v1931
    %v1933 = vmul.f32 %v1930, %v1932
    %v1934 = vadd.f32 %v1930, %v1933
    %vm1935 = vweird.f32 %v1929
    %vm1936 = vweird.f32 %v1930
    %vm1937 = vmor %vm1935, %vm1936
    %v1938 = vsel %vm1937, %v1930, %v1934
    %v1939 = vand.u32 2147483647, %v1929
    %vm1940 = vcmp.eq.f32.partialorder %v1939, 8.507059e+37
    %v1941 = vand.u32 %v1929, 2147483648
    %v1942 = vor.u32 1.1754944e-38, %v1941
    %v1943 = vsel %vm1940, %v1942, %v1938
    %v1944 = vmul.f32 %v1925, %v1943
    %v1945 = vpack.c.bf16 %v1944, %v1944
    %v1947 = vsel %vm1926, %v1945, 0
    %vm1949 = vcmask 1043456
    %v1951 = vsel %vm1949, %v1854, 0
    %v1954 = vsel %vm1949, %v1855, 0
    %v1957 = vsel %vm1949, %v1856, 0
    %v1960 = vsel %vm1949, %v1857, 0
    %1962 = vmatpush.bf16.msra.mxu0 0
    %1963 = vmatpush.bf16.msra.mxu0 0
    %1964 = vmatpush.bf16.msra.mxu0 0
    %1965 = vmatpush.bf16.msra.mxu0 0
    %1966 = vmatpush.bf16.msra.mxu0 0
    %1967 = vmatpush.bf16.msra.mxu0 0
    %1968 = vmatpush.bf16.msra.mxu0 0
    %1969 = vmatpush.bf16.msra.mxu0 %v1951
    %1970 = vmatmul.bf16.gmra.mxu0 %v1947
    %v1971 = vpop.f32.mrf.mxu0
    %v1972 = vadd.f32 0.0, %v1971
    %v1973 = vpop.f32.mrf.mxu0
    %1974 = vdwg.mxu0
    %1975 = vmatpush.bf16.msra.mxu0 0
    %1976 = vmatpush.bf16.msra.mxu0 0
    %1977 = vmatpush.bf16.msra.mxu0 0
    %1978 = vmatpush.bf16.msra.mxu0 0
    %1979 = vmatpush.bf16.msra.mxu0 0
    %1980 = vmatpush.bf16.msra.mxu0 0
    %1981 = vmatpush.bf16.msra.mxu0 0
    %1982 = vmatpush.bf16.msra.mxu0 %v1954
    %1983 = vmatmul.bf16.gmra.mxu0 %v1947
    %v1984 = vpop.f32.mrf.mxu0
    %v1985 = vadd.f32 0.0, %v1984
    %v1986 = vpop.f32.mrf.mxu0
    %1987 = vdwg.mxu0
    %1988 = vmatpush.bf16.msra.mxu0 0
    %1989 = vmatpush.bf16.msra.mxu0 0
    %1990 = vmatpush.bf16.msra.mxu0 0
    %1991 = vmatpush.bf16.msra.mxu0 0
    %1992 = vmatpush.bf16.msra.mxu0 0
    %1993 = vmatpush.bf16.msra.mxu0 0
    %1994 = vmatpush.bf16.msra.mxu0 0
    %1995 = vmatpush.bf16.msra.mxu0 %v1957
    %1996 = vmatmul.bf16.gmra.mxu0 %v1947
    %v1997 = vpop.f32.mrf.mxu0
    %v1998 = vadd.f32 0.0, %v1997
    %v1999 = vpop.f32.mrf.mxu0
    %2000 = vdwg.mxu0
    %2001 = vmatpush.bf16.msra.mxu0 0
    %2002 = vmatpush.bf16.msra.mxu0 0
    %2003 = vmatpush.bf16.msra.mxu0 0
    %2004 = vmatpush.bf16.msra.mxu0 0
    %2005 = vmatpush.bf16.msra.mxu0 0
    %2006 = vmatpush.bf16.msra.mxu0 0
    %2007 = vmatpush.bf16.msra.mxu0 0
    %2008 = vmatpush.bf16.msra.mxu0 %v1960
    %2009 = vmatmul.bf16.gmra.mxu0 %v1947
    %v2010 = vpop.f32.mrf.mxu0
    %v2011 = vadd.f32 0.0, %v2010
    %v2012 = vpop.f32.mrf.mxu0
    %2013 = vdwg.mxu0
    %v2014 = vpack.c.bf16 %v1844, %v1844
    %v2015 = vpack.c.bf16 %v1845, %v1845
    %v2016 = vpack.c.bf16 %v1846, %v1846
    %v2017 = vpack.c.bf16 %v1847, %v1847
    %v2018 = vpack.c.bf16 %v666, %v666
    %v2019 = vpack.c.bf16 %v708, %v708
    %v2020 = vpack.c.bf16 %v750, %v750
    %v2021 = vpack.c.bf16 %v792, %v792
    %2022 = vmatpush.bf16.xpose.msra.mxu0 0
    %2023 = vmatpush.bf16.xpose.msra.mxu0 0
    %2024 = vmatpush.bf16.xpose.msra.mxu0 0
    %2025 = vmatpush.bf16.xpose.msra.mxu0 0
    %2026 = vmatpush.bf16.xpose.msra.mxu0 0
    %2027 = vmatpush.bf16.xpose.msra.mxu0 0
    %2028 = vmatpush.bf16.xpose.msra.mxu0 0
    %2029 = vmatpush.bf16.xpose.msra.mxu0 %v2014
    %2030 = vmatmul.bf16.gmra.mxu0 %v1864
    %v2031 = vpop.f32.mrf.mxu0
    %v2032 = vadd.f32 0.0, %v2031
    %v2033 = vpop.f32.mrf.mxu0
    %2034 = vdwg.mxu0
    %2035 = vmatpush.bf16.xpose.msra.mxu0 0
    %2036 = vmatpush.bf16.xpose.msra.mxu0 0
    %2037 = vmatpush.bf16.xpose.msra.mxu0 0
    %2038 = vmatpush.bf16.xpose.msra.mxu0 0
    %2039 = vmatpush.bf16.xpose.msra.mxu0 0
    %2040 = vmatpush.bf16.xpose.msra.mxu0 0
    %2041 = vmatpush.bf16.xpose.msra.mxu0 0
    %2042 = vmatpush.bf16.xpose.msra.mxu0 %v2015
    %2043 = vmatmul.bf16.gmra.mxu0 %v1865
    %v2044 = vpop.f32.mrf.mxu0
    %v2045 = vadd.f32 %v2032, %v2044
    %v2046 = vpop.f32.mrf.mxu0
    %2047 = vdwg.mxu0
    %2048 = vmatpush.bf16.xpose.msra.mxu0 0
    %2049 = vmatpush.bf16.xpose.msra.mxu0 0
    %2050 = vmatpush.bf16.xpose.msra.mxu0 0
    %2051 = vmatpush.bf16.xpose.msra.mxu0 0
    %2052 = vmatpush.bf16.xpose.msra.mxu0 0
    %2053 = vmatpush.bf16.xpose.msra.mxu0 0
    %2054 = vmatpush.bf16.xpose.msra.mxu0 0
    %2055 = vmatpush.bf16.xpose.msra.mxu0 %v2016
    %2056 = vmatmul.bf16.gmra.mxu0 %v1866
    %v2057 = vpop.f32.mrf.mxu0
    %v2058 = vadd.f32 %v2045, %v2057
    %v2059 = vpop.f32.mrf.mxu0
    %2060 = vdwg.mxu0
    %2061 = vmatpush.bf16.xpose.msra.mxu0 0
    %2062 = vmatpush.bf16.xpose.msra.mxu0 0
    %2063 = vmatpush.bf16.xpose.msra.mxu0 0
    %2064 = vmatpush.bf16.xpose.msra.mxu0 0
    %2065 = vmatpush.bf16.xpose.msra.mxu0 0
    %2066 = vmatpush.bf16.xpose.msra.mxu0 0
    %2067 = vmatpush.bf16.xpose.msra.mxu0 0
    %2068 = vmatpush.bf16.xpose.msra.mxu0 %v2017
    %2069 = vmatmul.bf16.gmra.mxu0 %v1867
    %v2070 = vpop.f32.mrf.mxu0
    %v2071 = vadd.f32 %v2058, %v2070
    %v2072 = vpop.f32.mrf.mxu0
    %2073 = vdwg.mxu0
    %v2074 = vmul.f32 %v2071, 1.442695
    %v2075 = vpow.pop %v2074
    %v2076 = vsel %vm1926, %v2075, 0.0
    %2077 = vadd.xlane.f32.xlu0 %v2076
    %v2078 = vpop.xlane.xlu0 %2077
    %v2079 = vrcp.pop %v2078
    %v2080 = vmul.f32 %v2078, %v2079
    %v2081 = vsub.f32 1.0, %v2080
    %v2082 = vmul.f32 %v2079, %v2081
    %v2083 = vadd.f32 %v2079, %v2082
    %vm2084 = vweird.f32 %v2078
    %vm2085 = vweird.f32 %v2079
    %vm2086 = vmor %vm2084, %vm2085
    %v2087 = vsel %vm2086, %v2079, %v2083
    %v2088 = vand.u32 2147483647, %v2078
    %vm2089 = vcmp.eq.f32.partialorder %v2088, 8.507059e+37
    %v2090 = vand.u32 %v2078, 2147483648
    %v2091 = vor.u32 1.1754944e-38, %v2090
    %v2092 = vsel %vm2089, %v2091, %v2087
    %v2093 = vmul.f32 %v2075, %v2092
    %v2094 = vpack.c.bf16 %v2093, %v2093
    %v2096 = vsel %vm1926, %v2094, 0
    %v2099 = vsel %vm1949, %v2018, 0
    %v2102 = vsel %vm1949, %v2019, 0
    %v2105 = vsel %vm1949, %v2020, 0
    %v2108 = vsel %vm1949, %v2021, 0
    %2110 = vmatpush.bf16.msra.mxu0 0
    %2111 = vmatpush.bf16.msra.mxu0 0
    %2112 = vmatpush.bf16.msra.mxu0 0
    %2113 = vmatpush.bf16.msra.mxu0 0
    %2114 = vmatpush.bf16.msra.mxu0 0
    %2115 = vmatpush.bf16.msra.mxu0 0
    %2116 = vmatpush.bf16.msra.mxu0 0
    %2117 = vmatpush.bf16.msra.mxu0 %v2099
    %2118 = vmatmul.bf16.gmra.mxu0 %v2096
    %v2119 = vpop.f32.mrf.mxu0
    %v2120 = vadd.f32 0.0, %v2119
    %v2121 = vpop.f32.mrf.mxu0
    %2122 = vdwg.mxu0
    %2123 = vmatpush.bf16.msra.mxu0 0
    %2124 = vmatpush.bf16.msra.mxu0 0
    %2125 = vmatpush.bf16.msra.mxu0 0
    %2126 = vmatpush.bf16.msra.mxu0 0
    %2127 = vmatpush.bf16.msra.mxu0 0
    %2128 = vmatpush.bf16.msra.mxu0 0
    %2129 = vmatpush.bf16.msra.mxu0 0
    %2130 = vmatpush.bf16.msra.mxu0 %v2102
    %2131 = vmatmul.bf16.gmra.mxu0 %v2096
    %v2132 = vpop.f32.mrf.mxu0
    %v2133 = vadd.f32 0.0, %v2132
    %v2134 = vpop.f32.mrf.mxu0
    %2135 = vdwg.mxu0
    %2136 = vmatpush.bf16.msra.mxu0 0
    %2137 = vmatpush.bf16.msra.mxu0 0
    %2138 = vmatpush.bf16.msra.mxu0 0
    %2139 = vmatpush.bf16.msra.mxu0 0
    %2140 = vmatpush.bf16.msra.mxu0 0
    %2141 = vmatpush.bf16.msra.mxu0 0
    %2142 = vmatpush.bf16.msra.mxu0 0
    %2143 = vmatpush.bf16.msra.mxu0 %v2105
    %2144 = vmatmul.bf16.gmra.mxu0 %v2096
    %v2145 = vpop.f32.mrf.mxu0
    %v2146 = vadd.f32 0.0, %v2145
    %v2147 = vpop.f32.mrf.mxu0
    %2148 = vdwg.mxu0
    %2149 = vmatpush.bf16.msra.mxu0 0
    %2150 = vmatpush.bf16.msra.mxu0 0
    %2151 = vmatpush.bf16.msra.mxu0 0
    %2152 = vmatpush.bf16.msra.mxu0 0
    %2153 = vmatpush.bf16.msra.mxu0 0
    %2154 = vmatpush.bf16.msra.mxu0 0
    %2155 = vmatpush.bf16.msra.mxu0 0
    %2156 = vmatpush.bf16.msra.mxu0 %v2108
    %2157 = vmatmul.bf16.gmra.mxu0 %v2096
    %v2158 = vpop.f32.mrf.mxu0
    %v2159 = vadd.f32 0.0, %v2158
    %v2160 = vpop.f32.mrf.mxu0
    %2161 = vdwg.mxu0
    %v2162 = vpack.c.bf16 %v2120, %v1972
    %v2163 = vpack.c.bf16 %v2133, %v1985
    %v2164 = vpack.c.bf16 %v2146, %v1998
    %v2165 = vpack.c.bf16 %v2159, %v2011
    %v2166 = vld [vmem:[%s7] sm:$0xf]
    %v2167 = vld [vmem:[%s7 + $0x4] sm:$0xf]
    %v2168 = vld [vmem:[%s7 + $0x8] sm:$0xf]
    %v2169 = vld [vmem:[%s7 + $0xc] sm:$0xf]
    %v2170 = vld [vmem:[%s7 + $0x10] sm:$0xf]
    %v2171 = vld [vmem:[%s7 + $0x14] sm:$0xf]
    %v2172 = vld [vmem:[%s7 + $0x18] sm:$0xf]
    %v2173 = vld [vmem:[%s7 + $0x1c] sm:$0xf]
    %v2174 = vld [vmem:[%s7 + $0x20] sm:$0xf]
    %v2175 = vld [vmem:[%s7 + $0x24] sm:$0xf]
    %v2176 = vld [vmem:[%s7 + $0x28] sm:$0xf]
    %v2177 = vld [vmem:[%s7 + $0x2c] sm:$0xf]
    %v2178 = vld [vmem:[%s7 + $0x30] sm:$0xf]
    %v2179 = vld [vmem:[%s7 + $0x34] sm:$0xf]
    %v2180 = vld [vmem:[%s7 + $0x38] sm:$0xf]
    %v2181 = vld [vmem:[%s7 + $0x3c] sm:$0xf]
    %v2182 = vld [vmem:[%s7 + $0x40] sm:$0xf]
    %v2183 = vld [vmem:[%s7 + $0x44] sm:$0xf]
    %v2184 = vld [vmem:[%s7 + $0x48] sm:$0xf]
    %v2185 = vld [vmem:[%s7 + $0x4c] sm:$0xf]
    %v2186 = vld [vmem:[%s7 + $0x50] sm:$0xf]
    %v2187 = vld [vmem:[%s7 + $0x54] sm:$0xf]
    %v2188 = vld [vmem:[%s7 + $0x58] sm:$0xf]
    %v2189 = vld [vmem:[%s7 + $0x5c] sm:$0xf]
    %v2190 = vld [vmem:[%s7 + $0x60] sm:$0xf]
    %v2191 = vld [vmem:[%s7 + $0x64] sm:$0xf]
    %v2192 = vld [vmem:[%s7 + $0x68] sm:$0xf]
    %v2193 = vld [vmem:[%s7 + $0x6c] sm:$0xf]
    %v2194 = vld [vmem:[%s7 + $0x70] sm:$0xf]
    %v2195 = vld [vmem:[%s7 + $0x74] sm:$0xf]
    %v2196 = vld [vmem:[%s7 + $0x78] sm:$0xf]
    %v2197 = vld [vmem:[%s7 + $0x7c] sm:$0xf]
    %v2198 = vld [vmem:[%s7 + $0x80] sm:$0xf]
    %v2199 = vld [vmem:[%s7 + $0x84] sm:$0xf]
    %v2200 = vld [vmem:[%s7 + $0x88] sm:$0xf]
    %v2201 = vld [vmem:[%s7 + $0x8c] sm:$0xf]
    %v2202 = vld [vmem:[%s7 + $0x90] sm:$0xf]
    %v2203 = vld [vmem:[%s7 + $0x94] sm:$0xf]
    %v2204 = vld [vmem:[%s7 + $0x98] sm:$0xf]
    %v2205 = vld [vmem:[%s7 + $0x9c] sm:$0xf]
    %v2206 = vld [vmem:[%s7 + $0xa0] sm:$0xf]
    %v2207 = vld [vmem:[%s7 + $0xa4] sm:$0xf]
    %v2208 = vld [vmem:[%s7 + $0xa8] sm:$0xf]
    %v2209 = vld [vmem:[%s7 + $0xac] sm:$0xf]
    %v2210 = vld [vmem:[%s7 + $0xb0] sm:$0xf]
    %v2211 = vld [vmem:[%s7 + $0xb4] sm:$0xf]
    %v2212 = vld [vmem:[%s7 + $0xb8] sm:$0xf]
    %v2213 = vld [vmem:[%s7 + $0xbc] sm:$0xf]
    %v2214 = vld [vmem:[%s7 + $0xc0] sm:$0xf]
    %v2215 = vld [vmem:[%s7 + $0xc4] sm:$0xf]
    %v2216 = vld [vmem:[%s7 + $0xc8] sm:$0xf]
    %v2217 = vld [vmem:[%s7 + $0xcc] sm:$0xf]
    %v2218 = vld [vmem:[%s7 + $0xd0] sm:$0xf]
    %v2219 = vld [vmem:[%s7 + $0xd4] sm:$0xf]
    %v2220 = vld [vmem:[%s7 + $0xd8] sm:$0xf]
    %v2221 = vld [vmem:[%s7 + $0xdc] sm:$0xf]
    %v2222 = vld [vmem:[%s7 + $0xe0] sm:$0xf]
    %v2223 = vld [vmem:[%s7 + $0xe4] sm:$0xf]
    %v2224 = vld [vmem:[%s7 + $0xe8] sm:$0xf]
    %v2225 = vld [vmem:[%s7 + $0xec] sm:$0xf]
    %v2226 = vld [vmem:[%s7 + $0xf0] sm:$0xf]
    %v2227 = vld [vmem:[%s7 + $0xf4] sm:$0xf]
    %v2228 = vld [vmem:[%s7 + $0xf8] sm:$0xf]
    %v2229 = vld [vmem:[%s7 + $0xfc] sm:$0xf]
    %v2294 = vunpack.c.l.b16 %v2166
    %v2295 = vunpack.c.l.b16 %v2167
    %v2296 = vunpack.c.l.b16 %v2168
    %v2297 = vunpack.c.l.b16 %v2169
    %v2298 = vunpack.c.l.b16 %v2170
    %v2299 = vunpack.c.l.b16 %v2171
    %v2300 = vunpack.c.l.b16 %v2172
    %v2301 = vunpack.c.l.b16 %v2173
    %v2302 = vunpack.c.l.b16 %v2174
    %v2303 = vunpack.c.l.b16 %v2175
    %v2304 = vunpack.c.l.b16 %v2176
    %v2305 = vunpack.c.l.b16 %v2177
    %v2306 = vunpack.c.l.b16 %v2178
    %v2307 = vunpack.c.l.b16 %v2179
    %v2308 = vunpack.c.l.b16 %v2180
    %v2309 = vunpack.c.l.b16 %v2181
    %v2310 = vunpack.c.l.b16 %v2182
    %v2311 = vunpack.c.l.b16 %v2183
    %v2312 = vunpack.c.l.b16 %v2184
    %v2313 = vunpack.c.l.b16 %v2185
    %v2314 = vunpack.c.l.b16 %v2186
    %v2315 = vunpack.c.l.b16 %v2187
    %v2316 = vunpack.c.l.b16 %v2188
    %v2317 = vunpack.c.l.b16 %v2189
    %v2318 = vunpack.c.l.b16 %v2190
    %v2319 = vunpack.c.l.b16 %v2191
    %v2320 = vunpack.c.l.b16 %v2192
    %v2321 = vunpack.c.l.b16 %v2193
    %v2322 = vunpack.c.l.b16 %v2194
    %v2323 = vunpack.c.l.b16 %v2195
    %v2324 = vunpack.c.l.b16 %v2196
    %v2325 = vunpack.c.l.b16 %v2197
    %v2326 = vunpack.c.l.b16 %v2198
    %v2327 = vunpack.c.l.b16 %v2199
    %v2328 = vunpack.c.l.b16 %v2200
    %v2329 = vunpack.c.l.b16 %v2201
    %v2330 = vunpack.c.l.b16 %v2202
    %v2331 = vunpack.c.l.b16 %v2203
    %v2332 = vunpack.c.l.b16 %v2204
    %v2333 = vunpack.c.l.b16 %v2205
    %v2334 = vunpack.c.l.b16 %v2206
    %v2335 = vunpack.c.l.b16 %v2207
    %v2336 = vunpack.c.l.b16 %v2208
    %v2337 = vunpack.c.l.b16 %v2209
    %v2338 = vunpack.c.l.b16 %v2210
    %v2339 = vunpack.c.l.b16 %v2211
    %v2340 = vunpack.c.l.b16 %v2212
    %v2341 = vunpack.c.l.b16 %v2213
    %v2342 = vunpack.c.l.b16 %v2214
    %v2343 = vunpack.c.l.b16 %v2215
    %v2344 = vunpack.c.l.b16 %v2216
    %v2345 = vunpack.c.l.b16 %v2217
    %v2346 = vunpack.c.l.b16 %v2218
    %v2347 = vunpack.c.l.b16 %v2219
    %v2348 = vunpack.c.l.b16 %v2220
    %v2349 = vunpack.c.l.b16 %v2221
    %v2350 = vunpack.c.l.b16 %v2222
    %v2351 = vunpack.c.l.b16 %v2223
    %v2352 = vunpack.c.l.b16 %v2224
    %v2353 = vunpack.c.l.b16 %v2225
    %v2354 = vunpack.c.l.b16 %v2226
    %v2355 = vunpack.c.l.b16 %v2227
    %v2356 = vunpack.c.l.b16 %v2228
    %v2357 = vunpack.c.l.b16 %v2229
    %v2358 = vpack.c.b16 %v2295, %v2294
    %v2359 = vpack.c.b16 %v2297, %v2296
    %v2360 = vpack.c.b16 %v2299, %v2298
    %v2361 = vpack.c.b16 %v2301, %v2300
    %v2362 = vpack.c.b16 %v2303, %v2302
    %v2363 = vpack.c.b16 %v2305, %v2304
    %v2364 = vpack.c.b16 %v2307, %v2306
    %v2365 = vpack.c.b16 %v2309, %v2308
    %v2366 = vpack.c.b16 %v2311, %v2310
    %v2367 = vpack.c.b16 %v2313, %v2312
    %v2368 = vpack.c.b16 %v2315, %v2314
    %v2369 = vpack.c.b16 %v2317, %v2316
    %v2370 = vpack.c.b16 %v2319, %v2318
    %v2371 = vpack.c.b16 %v2321, %v2320
    %v2372 = vpack.c.b16 %v2323, %v2322
    %v2373 = vpack.c.b16 %v2325, %v2324
    %v2374 = vpack.c.b16 %v2327, %v2326
    %v2375 = vpack.c.b16 %v2329, %v2328
    %v2376 = vpack.c.b16 %v2331, %v2330
    %v2377 = vpack.c.b16 %v2333, %v2332
    %v2378 = vpack.c.b16 %v2335, %v2334
    %v2379 = vpack.c.b16 %v2337, %v2336
    %v2380 = vpack.c.b16 %v2339, %v2338
    %v2381 = vpack.c.b16 %v2341, %v2340
    %v2382 = vpack.c.b16 %v2343, %v2342
    %v2383 = vpack.c.b16 %v2345, %v2344
    %v2384 = vpack.c.b16 %v2347, %v2346
    %v2385 = vpack.c.b16 %v2349, %v2348
    %v2386 = vpack.c.b16 %v2351, %v2350
    %v2387 = vpack.c.b16 %v2353, %v2352
    %v2388 = vpack.c.b16 %v2355, %v2354
    %v2389 = vpack.c.b16 %v2357, %v2356
    %2422 = vmatpush.bf16.msra.mxu0 %v2365
    %2423 = vmatpush.bf16.msra.mxu0 %v2364
    %2424 = vmatpush.bf16.msra.mxu0 %v2363
    %2425 = vmatpush.bf16.msra.mxu0 %v2362
    %2426 = vmatpush.bf16.msra.mxu0 %v2361
    %2427 = vmatpush.bf16.msra.mxu0 %v2360
    %2428 = vmatpush.bf16.msra.mxu0 %v2359
    %2429 = vmatpush.bf16.msra.mxu0 %v2358
    %2430 = vmatmul.bf16.gmra.mxu0 %v2162
    %v2431 = vpop.f32.mrf.mxu0
    %v2432 = vadd.f32 0.0, %v2431
    %v2433 = vpop.f32.mrf.mxu0
    %v2434 = vadd.f32 0.0, %v2433
    %2435 = vdwg.mxu0
    %2436 = vmatpush.bf16.msra.mxu0 %v2373
    %2437 = vmatpush.bf16.msra.mxu0 %v2372
    %2438 = vmatpush.bf16.msra.mxu0 %v2371
    %2439 = vmatpush.bf16.msra.mxu0 %v2370
    %2440 = vmatpush.bf16.msra.mxu0 %v2369
    %2441 = vmatpush.bf16.msra.mxu0 %v2368
    %2442 = vmatpush.bf16.msra.mxu0 %v2367
    %2443 = vmatpush.bf16.msra.mxu0 %v2366
    %2444 = vmatmul.bf16.gmra.mxu0 %v2163
    %v2445 = vpop.f32.mrf.mxu0
    %v2446 = vadd.f32 %v2432, %v2445
    %v2447 = vpop.f32.mrf.mxu0
    %v2448 = vadd.f32 %v2434, %v2447
    %2449 = vdwg.mxu0
    %2450 = vmatpush.bf16.msra.mxu0 %v2381
    %2451 = vmatpush.bf16.msra.mxu0 %v2380
    %2452 = vmatpush.bf16.msra.mxu0 %v2379
    %2453 = vmatpush.bf16.msra.mxu0 %v2378
    %2454 = vmatpush.bf16.msra.mxu0 %v2377
    %2455 = vmatpush.bf16.msra.mxu0 %v2376
    %2456 = vmatpush.bf16.msra.mxu0 %v2375
    %2457 = vmatpush.bf16.msra.mxu0 %v2374
    %2458 = vmatmul.bf16.gmra.mxu0 %v2164
    %v2459 = vpop.f32.mrf.mxu0
    %v2460 = vadd.f32 %v2446, %v2459
    %v2461 = vpop.f32.mrf.mxu0
    %v2462 = vadd.f32 %v2448, %v2461
    %2463 = vdwg.mxu0
    %2464 = vmatpush.bf16.msra.mxu0 %v2389
    %2465 = vmatpush.bf16.msra.mxu0 %v2388
    %2466 = vmatpush.bf16.msra.mxu0 %v2387
    %2467 = vmatpush.bf16.msra.mxu0 %v2386
    %2468 = vmatpush.bf16.msra.mxu0 %v2385
    %2469 = vmatpush.bf16.msra.mxu0 %v2384
    %2470 = vmatpush.bf16.msra.mxu0 %v2383
    %2471 = vmatpush.bf16.msra.mxu0 %v2382
    %2472 = vmatmul.bf16.gmra.mxu0 %v2165
    %v2473 = vpop.f32.mrf.mxu0
    %v2474 = vadd.f32 %v2460, %v2473
    %v2475 = vpop.f32.mrf.mxu0
    %v2476 = vadd.f32 %v2462, %v2475
    %2477 = vdwg.mxu0
    %v2478 = vld [vmem:[%s2] sm:$0xff]
    %v2479 = vadd.f32 %v2474, %v2478
    %v2480 = vadd.f32 %v2476, %v2478
    %2481 = vst [vmem:[#allocation2] sm:$0xff] %v2479
    %2482 = vst [vmem:[#allocation2 + $0x8] sm:$0xff] %v2480
    // Predicated region
    $region34: #{combined_model_sink333.1} parent=1 // pred_check
      _
    $region35: #{combined_model_sink333.1} parent=1 // pred_check_branch
      %2484 = sbr.rel (0) target = $region37
    $region36: #{combined_model_sink333.1} parent=1 // pred_region
      %2486 = vsyncadd [#allocation3], 0
      %s2487 = sshll.u32 [#allocation2], 4
      %s2488 = int_to_ptr.vmem [resolvable:$true] %s2487
      %s2489 = sshll.u32 %s8, 4
      %s2490 = int_to_ptr.hbm [resolvable:$true] %s2489
      %2495 = dma.vmem_to_hbm [thread:$0]  %s2488, 256, %s2490, [#allocation3], 128, 128, 8
    $region37: #{combined_model_sink333.1} parent=1 // pred_fallthru
      _
    // Predicated region
    $region38: #{combined_model_sink333.1} parent=1 // pred_check
      _
    $region39: #{combined_model_sink333.1} parent=1 // pred_check_branch
      %2497 = sbr.rel (0) target = $region41
    $region40: #{combined_model_sink333.1} parent=1 // pred_region
      %2499 = dma.done [#allocation3], 256
    $region41: #{combined_model_sink333.1} parent=1 // pred_fallthru
      _
    %2500 = vsyncpa [#allocation3], 1

</llo_original>
